<compile_context>
chip_gen: v7x
topology: tpu7x:2x2x1
jax: 0.10.0
libtpu: 0.0.40
codegen_flags: <defaults>
</compile_context>

<pallas_src>
import jax
import jax.numpy as jnp
from jax.experimental import pallas as pl
from jax.experimental.pallas import tpu as pltpu


def mlp_kernel(x_ref, w1_ref, b1_ref, w2_ref, b2_ref, w3_ref, b3_ref, o_ref):
    # Single-pass MLP on one batch tile; all weights are VMEM-resident.
    # fc1: (bt, K) bf16 @ (K, H) bf16 -> f32
    h1 = jnp.dot(x_ref[...], w1_ref[...], preferred_element_type=jnp.float32)
    h1 = jnp.maximum(h1 + b1_ref[...], 0.0)
    # fc2: (bt, H) bf16 @ (H, H) bf16 -> f32
    h2 = jnp.dot(h1.astype(jnp.bfloat16), w2_ref[...],
                 preferred_element_type=jnp.float32)
    h2 = jnp.maximum(h2 + b2_ref[...], 0.0)
    # fc3: (bt, H) bf16 @ (H, OUT) bf16 -> f32
    out = jnp.dot(h2.astype(jnp.bfloat16), w3_ref[...],
                  preferred_element_type=jnp.float32)
    o_ref[...] = (out + b3_ref[...]).astype(o_ref.dtype)


def mlp_forward(x, w1, b1, w2, b2, w3, b3, *, bt=None):
    B, K = x.shape
    H = w1.shape[1]
    OUT = w3.shape[1]

    if bt is None:
        bt = min(B, 1024)
        # Give megacore (v7x) at least two batch blocks to shard when the
        # batch is big enough; weights are resident so this costs nothing.
        if B // bt < 2 and B >= 16 and (B // 2) % 8 == 0:
            bt = B // 2
    assert B % bt == 0 and bt % 8 == 0, "batch block must be a multiple of 8"
    assert K % 128 == 0, "input features must be a multiple of 128"
    # TODO(synk): no masked tail path for ragged batch sizes (B not a
    # multiple of 8); pad the batch in the caller if needed.

    # bf16 storage/feed for the big operands; biases stay f32.
    xb = x.astype(jnp.bfloat16)
    w1b = w1.astype(jnp.bfloat16)
    w2b = w2.astype(jnp.bfloat16)
    w3b = w3.astype(jnp.bfloat16)

    grid = (B // bt,)
    grid_spec = pltpu.PrefetchScalarGridSpec(
        num_scalar_prefetch=0,
        grid=grid,
        in_specs=[
            pl.BlockSpec((bt, K), lambda b: (b, 0)),     # x  (streamed)
            pl.BlockSpec((K, H), lambda b: (0, 0)),      # w1 (resident)
            pl.BlockSpec((1, H), lambda b: (0, 0)),      # b1 (resident)
            pl.BlockSpec((H, H), lambda b: (0, 0)),      # w2 (resident)
            pl.BlockSpec((1, H), lambda b: (0, 0)),      # b2 (resident)
            pl.BlockSpec((H, OUT), lambda b: (0, 0)),    # w3 (resident)
            pl.BlockSpec((1, OUT), lambda b: (0, 0)),    # b3 (resident)
        ],
        out_specs=pl.BlockSpec((bt, OUT), lambda b: (b, 0)),
    )

    flops = 2 * B * (K * H + H * H + H * OUT)
    bytes_accessed = (xb.size * 2 + w1b.size * 2 + w2b.size * 2 + w3b.size * 2
                      + (b1.size + b2.size + b3.size) * 4 + B * OUT * 4)

    return pl.pallas_call(
        mlp_kernel,
        out_shape=jax.ShapeDtypeStruct((B, OUT), jnp.float32),
        grid_spec=grid_spec,
        compiler_params=pltpu.CompilerParams(
            dimension_semantics=("parallel",),
            vmem_limit_bytes=64 * 1024 * 1024),
        cost_estimate=pl.CostEstimate(
            flops=flops, transcendentals=0, bytes_accessed=bytes_accessed),
    )(xb, w1b, b1, w2b, b2, w3b, b3)


def init_linear(key, fan_in, fan_out):
    # Matches torch.nn.Linear default init: U(-1/sqrt(fan_in), 1/sqrt(fan_in))
    kw, kb = jax.random.split(key)
    bound = 1.0 / jnp.sqrt(fan_in)
    w = jax.random.uniform(kw, (fan_in, fan_out), jnp.float32, -bound, bound)
    b = jax.random.uniform(kb, (1, fan_out), jnp.float32, -bound, bound)
    return w, b


if __name__ == "__main__":
    key = jax.random.PRNGKey(0)
    k_x, k1, k2, k3 = jax.random.split(key, 4)

    B = 8
    IN, H, OUT = 32 * 32 * 3, 200, 10

    x = jax.random.normal(k_x, (B, IN), jnp.float32)
    w1, b1 = init_linear(k1, IN, H)
    w2, b2 = init_linear(k2, H, H)
    w3, b3 = init_linear(k3, H, OUT)

    out = mlp_forward(x, w1, b1, w2, b2, w3, b3)
    jax.block_until_ready(out)

    # Reference in plain JAX with the same bf16 rounding the kernel applies.
    rnd = lambda a: a.astype(jnp.bfloat16).astype(jnp.float32)
    hp = jax.lax.Precision.HIGHEST
    ref = jnp.maximum(jnp.dot(rnd(x), rnd(w1), precision=hp) + b1, 0.0)
    ref = jnp.maximum(jnp.dot(rnd(ref), rnd(w2), precision=hp) + b2, 0.0)
    ref = jnp.dot(rnd(ref), rnd(w3), precision=hp) + b3

    assert out.shape == (B, OUT)
    assert jnp.allclose(out, ref, atol=1e-2, rtol=1e-2), (
        float(jnp.max(jnp.abs(out - ref))))

    print("KERNEL_OK")
</pallas_src>

<mosaic_0001>
module attributes {stable_mosaic.version = 11 : i64} {
  func.func @mlp_kernel(%arg0: i32, %arg1: memref<8x3072xbf16, #tpu.memory_space<vmem>>, %arg2: memref<3072x200xbf16, #tpu.memory_space<vmem>>, %arg3: memref<1x200xf32, #tpu.memory_space<vmem>>, %arg4: memref<200x200xbf16, #tpu.memory_space<vmem>>, %arg5: memref<1x200xf32, #tpu.memory_space<vmem>>, %arg6: memref<200x10xbf16, #tpu.memory_space<vmem>>, %arg7: memref<1x10xf32, #tpu.memory_space<vmem>>, %arg8: memref<8x10xf32, #tpu.memory_space<vmem>>) attributes {dimension_semantics = [#tpu.dimension_semantics<parallel>], iteration_bounds = array<i64: 1>, scalar_prefetch = 0 : i64, scratch_operands = 0 : i64, tpu.core_type = #tpu.core_type<tc>, window_params = [{transform_indices = @transform_0, window_bounds = array<i64: 8, 3072>}, {pipeline_mode = #tpu.pipeline_mode<synchronous>, transform_indices = @transform_1, window_bounds = array<i64: 3072, 200>}, {pipeline_mode = #tpu.pipeline_mode<synchronous>, transform_indices = @transform_2, window_bounds = array<i64: 1, 200>}, {pipeline_mode = #tpu.pipeline_mode<synchronous>, transform_indices = @transform_3, window_bounds = array<i64: 200, 200>}, {pipeline_mode = #tpu.pipeline_mode<synchronous>, transform_indices = @transform_4, window_bounds = array<i64: 1, 200>}, {pipeline_mode = #tpu.pipeline_mode<synchronous>, transform_indices = @transform_5, window_bounds = array<i64: 200, 10>}, {pipeline_mode = #tpu.pipeline_mode<synchronous>, transform_indices = @transform_6, window_bounds = array<i64: 1, 10>}, {transform_indices = @transform_7, window_bounds = array<i64: 8, 10>}]} {
    %c0 = arith.constant 0 : index
    %c0_0 = arith.constant 0 : index
    %0 = vector.load %arg1[%c0, %c0_0] : memref<8x3072xbf16, #tpu.memory_space<vmem>>, vector<8x3072xbf16>
    %c0_1 = arith.constant 0 : index
    %c0_2 = arith.constant 0 : index
    %1 = vector.load %arg2[%c0_1, %c0_2] : memref<3072x200xbf16, #tpu.memory_space<vmem>>, vector<3072x200xbf16>
    %cst = arith.constant dense<0.000000e+00> : vector<8x200xf32>
    %2 = tpu.matmul %0, %1, %cst {dimension_numbers = #tpu.dot_dimension_numbers<[1], [0], [0], [1], [0, 0, 1, 1], [], []>} : vector<8x3072xbf16>, vector<3072x200xbf16>, vector<8x200xf32> -> vector<8x200xf32>
    %c0_3 = arith.constant 0 : index
    %c0_4 = arith.constant 0 : index
    %3 = vector.load %arg3[%c0_3, %c0_4] : memref<1x200xf32, #tpu.memory_space<vmem>>, vector<1x200xf32>
    %4 = vector.broadcast %3 : vector<1x200xf32> to vector<8x200xf32>
    %5 = arith.addf %2, %4 : vector<8x200xf32>
    %cst_5 = arith.constant 0.000000e+00 : f32
    %6 = vector.broadcast %cst_5 : f32 to vector<8x200xf32>
    %7 = arith.maximumf %5, %6 : vector<8x200xf32>
    %8 = arith.truncf %7 : vector<8x200xf32> to vector<8x200xbf16>
    %c0_6 = arith.constant 0 : index
    %c0_7 = arith.constant 0 : index
    %9 = vector.load %arg4[%c0_6, %c0_7] : memref<200x200xbf16, #tpu.memory_space<vmem>>, vector<200x200xbf16>
    %cst_8 = arith.constant dense<0.000000e+00> : vector<8x200xf32>
    %10 = tpu.matmul %8, %9, %cst_8 {dimension_numbers = #tpu.dot_dimension_numbers<[1], [0], [0], [1], [0, 0, 1, 1], [], []>} : vector<8x200xbf16>, vector<200x200xbf16>, vector<8x200xf32> -> vector<8x200xf32>
    %c0_9 = arith.constant 0 : index
    %c0_10 = arith.constant 0 : index
    %11 = vector.load %arg5[%c0_9, %c0_10] : memref<1x200xf32, #tpu.memory_space<vmem>>, vector<1x200xf32>
    %12 = vector.broadcast %11 : vector<1x200xf32> to vector<8x200xf32>
    %13 = arith.addf %10, %12 : vector<8x200xf32>
    %cst_11 = arith.constant 0.000000e+00 : f32
    %14 = vector.broadcast %cst_11 : f32 to vector<8x200xf32>
    %15 = arith.maximumf %13, %14 : vector<8x200xf32>
    %16 = arith.truncf %15 : vector<8x200xf32> to vector<8x200xbf16>
    %c0_12 = arith.constant 0 : index
    %c0_13 = arith.constant 0 : index
    %17 = vector.load %arg6[%c0_12, %c0_13] : memref<200x10xbf16, #tpu.memory_space<vmem>>, vector<200x10xbf16>
    %cst_14 = arith.constant dense<0.000000e+00> : vector<8x10xf32>
    %18 = tpu.matmul %16, %17, %cst_14 {dimension_numbers = #tpu.dot_dimension_numbers<[1], [0], [0], [1], [0, 0, 1, 1], [], []>} : vector<8x200xbf16>, vector<200x10xbf16>, vector<8x10xf32> -> vector<8x10xf32>
    %c0_15 = arith.constant 0 : index
    %c0_16 = arith.constant 0 : index
    %19 = vector.load %arg7[%c0_15, %c0_16] : memref<1x10xf32, #tpu.memory_space<vmem>>, vector<1x10xf32>
    %20 = vector.broadcast %19 : vector<1x10xf32> to vector<8x10xf32>
    %21 = arith.addf %18, %20 : vector<8x10xf32>
    %c0_17 = arith.constant 0 : index
    %c0_18 = arith.constant 0 : index
    %22 = vector.load %arg8[%c0_17, %c0_18] : memref<8x10xf32, #tpu.memory_space<vmem>>, vector<8x10xf32>
    tpu.vector_store %arg8[%c0_17, %c0_18], %21 {strides = array<i32>} : memref<8x10xf32, #tpu.memory_space<vmem>>, vector<8x10xf32>,
    return
  }
  func.func @transform_0(%arg0: i32) -> (i32, i32) {
    %c0_i32 = arith.constant 0 : i32
    %c0_i32_0 = arith.constant 0 : i32
    return %arg0, %c0_i32 : i32, i32
  }
  func.func @transform_1(%arg0: i32) -> (i32, i32) {
    %c0_i32 = arith.constant 0 : i32
    %c0_i32_0 = arith.constant 0 : i32
    %c0_i32_1 = arith.constant 0 : i32
    return %c0_i32, %c0_i32_0 : i32, i32
  }
  func.func @transform_2(%arg0: i32) -> (i32, i32) {
    %c0_i32 = arith.constant 0 : i32
    %c0_i32_0 = arith.constant 0 : i32
    %c0_i32_1 = arith.constant 0 : i32
    return %c0_i32, %c0_i32_0 : i32, i32
  }
  func.func @transform_3(%arg0: i32) -> (i32, i32) {
    %c0_i32 = arith.constant 0 : i32
    %c0_i32_0 = arith.constant 0 : i32
    %c0_i32_1 = arith.constant 0 : i32
    return %c0_i32, %c0_i32_0 : i32, i32
  }
  func.func @transform_4(%arg0: i32) -> (i32, i32) {
    %c0_i32 = arith.constant 0 : i32
    %c0_i32_0 = arith.constant 0 : i32
    %c0_i32_1 = arith.constant 0 : i32
    return %c0_i32, %c0_i32_0 : i32, i32
  }
  func.func @transform_5(%arg0: i32) -> (i32, i32) {
    %c0_i32 = arith.constant 0 : i32
    %c0_i32_0 = arith.constant 0 : i32
    %c0_i32_1 = arith.constant 0 : i32
    return %c0_i32, %c0_i32_0 : i32, i32
  }
  func.func @transform_6(%arg0: i32) -> (i32, i32) {
    %c0_i32 = arith.constant 0 : i32
    %c0_i32_0 = arith.constant 0 : i32
    %c0_i32_1 = arith.constant 0 : i32
    return %c0_i32, %c0_i32_0 : i32, i32
  }
  func.func @transform_7(%arg0: i32) -> (i32, i32) {
    %c0_i32 = arith.constant 0 : i32
    %c0_i32_0 = arith.constant 0 : i32
    return %arg0, %c0_i32 : i32, i32
  }
}

</mosaic_0001>

<llo_original>
// kernel: tpu_custom_call.1
$region0: #{tpu_custom_call.1}
  #allocation0 [shape = 'u32[]', space=smem, size = 0x4, offset = 0x4, fixed_abs, tag = 'smem constant byte address 0x4 - core index']
  #allocation1 [shape = 'u32[144,128]{1,0:T(1,128)}', space=vmem, size = 0x12000, scoped, tag = 'internal scratch']
  %s0 = inlined_call_operand.hbm [shape: bf16[8,3072], index: 0, kind: input, shape index: {}]
  %s1 = inlined_call_operand.hbm [shape: bf16[3072,200], index: 1, kind: input, shape index: {}]
  %s2 = inlined_call_operand.hbm [shape: f32[1,200], index: 2, kind: input, shape index: {}]
  %s3 = inlined_call_operand.hbm [shape: bf16[200,200], index: 3, kind: input, shape index: {}]
  %s4 = inlined_call_operand.hbm [shape: f32[1,200], index: 4, kind: input, shape index: {}]
  %s5 = inlined_call_operand.hbm [shape: bf16[200,10], index: 5, kind: input, shape index: {}]
  %s6 = inlined_call_operand.hbm [shape: f32[1,10], index: 6, kind: input, shape index: {}]
  %s7 = inlined_call_operand.hbm [shape: f32[8,10], index: 7, kind: output, shape index: {}]
  %s8 = sld [smem:[#allocation0]]
  $region66: #{tpu_custom_call.1} parent=0
    _
  %s10 = ssub.s32 1, %s8
  %s11 = scalar_select 0, %s10, %s8
  $region1: #{tpu_custom_call.1} parent=0
    #allocation2 [shape = 'u8[49152]{0}', space=vmem, size = 0xc000, scoped, tag = 'input window, operand 0, single buffered']
    #allocation3 [shape = 's32[1]{0}', space=sflag, size = 0x4, scoped, tag = 'scoped memory for tpu_custom_call.1']
    #allocation4 [shape = 's32[1]{0}', space=sflag, size = 0x4, scoped, tag = 'scoped memory for tpu_custom_call.1']
    #allocation5 [shape = 'u8[1572864]{0}', space=vmem, size = 0x180000, scoped, tag = 'input window, operand 1, single buffered']
    #allocation6 [shape = 's32[1]{0}', space=sflag, size = 0x4, scoped, tag = 'scoped memory for tpu_custom_call.1']
    #allocation7 [shape = 'u8[1024]{0}', space=vmem, size = 0x400, scoped, tag = 'input window, operand 2, single buffered']
    #allocation8 [shape = 'u8[102400]{0}', space=vmem, size = 0x19000, scoped, tag = 'input window, operand 3, single buffered']
    #allocation9 [shape = 's32[1]{0}', space=sflag, size = 0x4, scoped, tag = 'scoped memory for tpu_custom_call.1']
    #allocation10 [shape = 'u8[1024]{0}', space=vmem, size = 0x400, scoped, tag = 'input window, operand 4, single buffered']
    #allocation11 [shape = 'u8[51200]{0}', space=vmem, size = 0xc800, scoped, tag = 'input window, operand 5, single buffered']
    #allocation12 [shape = 's32[1]{0}', space=sflag, size = 0x4, scoped, tag = 'scoped memory for tpu_custom_call.1']
    #allocation13 [shape = 'u8[512]{0}', space=vmem, size = 0x400, scoped, tag = 'input window, operand 6, single buffered']
    #allocation14 [shape = 'u8[4096]{0}', space=vmem, size = 0x1000, scoped, tag = 'output window, operand 0, single buffered']
    %12 = vsyncpa [#allocation3], 0
    %13 = vsyncpa [#allocation6], 0
    %14 = vsyncpa [#allocation9], 0
    %15 = vsyncpa [#allocation12], 0
    %16 = vsyncpa [#allocation4], 0
    // Predicated region
    $region2: #{tpu_custom_call.1} parent=1 // pred_check
      _
    $region3: #{tpu_custom_call.1} parent=1 // pred_check_branch
      %18 = sbr.rel (0) target = $region5
    $region4: #{tpu_custom_call.1} parent=1 // pred_region
      %s20 = ssub.s32 1536, 1536
      %21 = vsyncadd [#allocation3], %s20
      %s23 = sshll.u32 [#allocation2], 4
      %s24 = int_to_ptr.vmem [resolvable:$true] %s23
      %26 = dma.hbm_to_vmem [thread:$0]  %s0, 1536, %s24, [#allocation3]
    $region5: #{tpu_custom_call.1} parent=1 // pred_fallthru
      _
    // Predicated region
    $region6: #{tpu_custom_call.1} parent=1 // pred_check
      _
    $region7: #{tpu_custom_call.1} parent=1 // pred_check_branch
      %28 = sbr.rel (0) target = $region9
    $region8: #{tpu_custom_call.1} parent=1 // pred_region
      %s30 = ssub.s32 49152, 49152
      %31 = vsyncadd [#allocation6], %s30
      %s32 = sshll.u32 [#allocation5], 4
      %s33 = int_to_ptr.vmem [resolvable:$true] %s32
      %38 = dma.hbm_to_vmem [thread:$0]  %s1, 49152, %s33, [#allocation6], 128, 128, 8
    $region9: #{tpu_custom_call.1} parent=1 // pred_fallthru
      _
    // Predicated region
    $region10: #{tpu_custom_call.1} parent=1 // pred_check
      _
    $region11: #{tpu_custom_call.1} parent=1 // pred_check_branch
      %40 = sbr.rel (0) target = $region13
    $region12: #{tpu_custom_call.1} parent=1 // pred_region
      %s42 = ssub.s32 32, 32
      %43 = vsyncadd [#allocation6], %s42
      %s45 = sshll.u32 [#allocation7], 4
      %s46 = int_to_ptr.vmem [resolvable:$true] %s45
      %48 = dma.hbm_to_vmem [thread:$0]  %s2, 32, %s46, [#allocation6]
    $region13: #{tpu_custom_call.1} parent=1 // pred_fallthru
      _
    // Predicated region
    $region14: #{tpu_custom_call.1} parent=1 // pred_check
      _
    $region15: #{tpu_custom_call.1} parent=1 // pred_check_branch
      %50 = sbr.rel (0) target = $region17
    $region16: #{tpu_custom_call.1} parent=1 // pred_region
      %s52 = ssub.s32 3200, 3200
      %53 = vsyncadd [#allocation9], %s52
      %s54 = sshll.u32 [#allocation8], 4
      %s55 = int_to_ptr.vmem [resolvable:$true] %s54
      %60 = dma.hbm_to_vmem [thread:$0]  %s3, 3200, %s55, [#allocation9], 128, 128, 8
    $region17: #{tpu_custom_call.1} parent=1 // pred_fallthru
      _
    // Predicated region
    $region18: #{tpu_custom_call.1} parent=1 // pred_check
      _
    $region19: #{tpu_custom_call.1} parent=1 // pred_check_branch
      %62 = sbr.rel (0) target = $region21
    $region20: #{tpu_custom_call.1} parent=1 // pred_region
      %s64 = ssub.s32 32, 32
      %65 = vsyncadd [#allocation9], %s64
      %s67 = sshll.u32 [#allocation10], 4
      %s68 = int_to_ptr.vmem [resolvable:$true] %s67
      %70 = dma.hbm_to_vmem [thread:$0]  %s4, 32, %s68, [#allocation9]
    $region21: #{tpu_custom_call.1} parent=1 // pred_fallthru
      _
    // Predicated region
    $region22: #{tpu_custom_call.1} parent=1 // pred_check
      _
    $region23: #{tpu_custom_call.1} parent=1 // pred_check_branch
      %72 = sbr.rel (0) target = $region25
    $region24: #{tpu_custom_call.1} parent=1 // pred_region
      %s74 = ssub.s32 1600, 1600
      %75 = vsyncadd [#allocation12], %s74
      %s76 = sshll.u32 [#allocation11], 4
      %s77 = int_to_ptr.vmem [resolvable:$true] %s76
      %82 = dma.hbm_to_vmem [thread:$0]  %s5, 1600, %s77, [#allocation12], 64, 64, 4
    $region25: #{tpu_custom_call.1} parent=1 // pred_fallthru
      _
    // Predicated region
    $region26: #{tpu_custom_call.1} parent=1 // pred_check
      _
    $region27: #{tpu_custom_call.1} parent=1 // pred_check_branch
      %84 = sbr.rel (0) target = $region29
    $region28: #{tpu_custom_call.1} parent=1 // pred_region
      %s86 = ssub.s32 16, 16
      %87 = vsyncadd [#allocation12], %s86
      %s89 = sshll.u32 [#allocation13], 4
      %s90 = int_to_ptr.vmem [resolvable:$true] %s89
      %92 = dma.hbm_to_vmem [thread:$0]  %s6, 16, %s90, [#allocation12]
    $region29: #{tpu_custom_call.1} parent=1 // pred_fallthru
      _
    // Predicated region
    $region30: #{tpu_custom_call.1} parent=1 // pred_check
      _
    $region31: #{tpu_custom_call.1} parent=1 // pred_check_branch
      %94 = sbr.rel (0) target = $region33
    $region32: #{tpu_custom_call.1} parent=1 // pred_region
      %95 = dma.done [#allocation3], 1536
    $region33: #{tpu_custom_call.1} parent=1 // pred_fallthru
      _
    // Predicated region
    $region34: #{tpu_custom_call.1} parent=1 // pred_check
      _
    $region35: #{tpu_custom_call.1} parent=1 // pred_check_branch
      %97 = sbr.rel (0) target = $region37
    $region36: #{tpu_custom_call.1} parent=1 // pred_region
      %98 = dma.done [#allocation6], 49152
    $region37: #{tpu_custom_call.1} parent=1 // pred_fallthru
      _
    // Predicated region
    $region38: #{tpu_custom_call.1} parent=1 // pred_check
      _
    $region39: #{tpu_custom_call.1} parent=1 // pred_check_branch
      %100 = sbr.rel (0) target = $region41
    $region40: #{tpu_custom_call.1} parent=1 // pred_region
      %101 = dma.done [#allocation6], 32
    $region41: #{tpu_custom_call.1} parent=1 // pred_fallthru
      _
    // Predicated region
    $region42: #{tpu_custom_call.1} parent=1 // pred_check
      _
    $region43: #{tpu_custom_call.1} parent=1 // pred_check_branch
      %103 = sbr.rel (0) target = $region45
    $region44: #{tpu_custom_call.1} parent=1 // pred_region
      %104 = dma.done [#allocation9], 3200
    $region45: #{tpu_custom_call.1} parent=1 // pred_fallthru
      _
    // Predicated region
    $region46: #{tpu_custom_call.1} parent=1 // pred_check
      _
    $region47: #{tpu_custom_call.1} parent=1 // pred_check_branch
      %106 = sbr.rel (0) target = $region49
    $region48: #{tpu_custom_call.1} parent=1 // pred_region
      %107 = dma.done [#allocation9], 32
    $region49: #{tpu_custom_call.1} parent=1 // pred_fallthru
      _
    // Predicated region
    $region50: #{tpu_custom_call.1} parent=1 // pred_check
      _
    $region51: #{tpu_custom_call.1} parent=1 // pred_check_branch
      %109 = sbr.rel (0) target = $region53
    $region52: #{tpu_custom_call.1} parent=1 // pred_region
      %110 = dma.done [#allocation12], 1600
    $region53: #{tpu_custom_call.1} parent=1 // pred_fallthru
      _
    // Predicated region
    $region54: #{tpu_custom_call.1} parent=1 // pred_check
      _
    $region55: #{tpu_custom_call.1} parent=1 // pred_check_branch
      %112 = sbr.rel (0) target = $region57
    $region56: #{tpu_custom_call.1} parent=1 // pred_region
      %113 = dma.done [#allocation12], 16
    $region57: #{tpu_custom_call.1} parent=1 // pred_fallthru
      _
    %v115 = vld [vmem:[#allocation2] sm:$0xff]
    %v116 = vld [vmem:[#allocation2 + $0x8] sm:$0xff]
    %v117 = vld [vmem:[#allocation2 + $0x10] sm:$0xff]
    %v118 = vld [vmem:[#allocation2 + $0x18] sm:$0xff]
    %v119 = vld [vmem:[#allocation2 + $0x20] sm:$0xff]
    %v120 = vld [vmem:[#allocation2 + $0x28] sm:$0xff]
    %v121 = vld [vmem:[#allocation2 + $0x30] sm:$0xff]
    %v122 = vld [vmem:[#allocation2 + $0x38] sm:$0xff]
    %v123 = vld [vmem:[#allocation2 + $0x40] sm:$0xff]
    %v124 = vld [vmem:[#allocation2 + $0x48] sm:$0xff]
    %v125 = vld [vmem:[#allocation2 + $0x50] sm:$0xff]
    %v126 = vld [vmem:[#allocation2 + $0x58] sm:$0xff]
    %v127 = vld [vmem:[#allocation5] sm:$0xff]
    %v128 = vld [vmem:[#allocation5 + $0x8] sm:$0xff]
    %v129 = vld [vmem:[#allocation5 + $0x10] sm:$0xff]
    %v130 = vld [vmem:[#allocation5 + $0x18] sm:$0xff]
    %v131 = vld [vmem:[#allocation5 + $0x20] sm:$0xff]
    %v132 = vld [vmem:[#allocation5 + $0x28] sm:$0xff]
    %v133 = vld [vmem:[#allocation5 + $0x30] sm:$0xff]
    %v134 = vld [vmem:[#allocation5 + $0x38] sm:$0xff]
    %v135 = vld [vmem:[#allocation5 + $0x40] sm:$0xff]
    %v136 = vld [vmem:[#allocation5 + $0x48] sm:$0xff]
    %v137 = vld [vmem:[#allocation5 + $0x50] sm:$0xff]
    %v138 = vld [vmem:[#allocation5 + $0x58] sm:$0xff]
    %v139 = vld [vmem:[#allocation5 + $0x60] sm:$0xff]
    %v140 = vld [vmem:[#allocation5 + $0x68] sm:$0xff]
    %v141 = vld [vmem:[#allocation5 + $0x70] sm:$0xff]
    %v142 = vld [vmem:[#allocation5 + $0x78] sm:$0xff]
    %v143 = vld [vmem:[#allocation5 + $0x80] sm:$0xff]
    %v144 = vld [vmem:[#allocation5 + $0x88] sm:$0xff]
    %v145 = vld [vmem:[#allocation5 + $0x90] sm:$0xff]
    %v146 = vld [vmem:[#allocation5 + $0x98] sm:$0xff]
    %v147 = vld [vmem:[#allocation5 + $0xa0] sm:$0xff]
    %v148 = vld [vmem:[#allocation5 + $0xa8] sm:$0xff]
    %v149 = vld [vmem:[#allocation5 + $0xb0] sm:$0xff]
    %v150 = vld [vmem:[#allocation5 + $0xb8] sm:$0xff]
    %v151 = vld [vmem:[#allocation5 + $0xc0] sm:$0xff]
    %v152 = vld [vmem:[#allocation5 + $0xc8] sm:$0xff]
    %v153 = vld [vmem:[#allocation5 + $0xd0] sm:$0xff]
    %v154 = vld [vmem:[#allocation5 + $0xd8] sm:$0xff]
    %v155 = vld [vmem:[#allocation5 + $0xe0] sm:$0xff]
    %v156 = vld [vmem:[#allocation5 + $0xe8] sm:$0xff]
    %v157 = vld [vmem:[#allocation5 + $0xf0] sm:$0xff]
    %v158 = vld [vmem:[#allocation5 + $0xf8] sm:$0xff]
    %v159 = vld [vmem:[#allocation5 + $0x100] sm:$0xff]
    %v160 = vld [vmem:[#allocation5 + $0x108] sm:$0xff]
    %v161 = vld [vmem:[#allocation5 + $0x110] sm:$0xff]
    %v162 = vld [vmem:[#allocation5 + $0x118] sm:$0xff]
    %v163 = vld [vmem:[#allocation5 + $0x120] sm:$0xff]
    %v164 = vld [vmem:[#allocation5 + $0x128] sm:$0xff]
    %v165 = vld [vmem:[#allocation5 + $0x130] sm:$0xff]
    %v166 = vld [vmem:[#allocation5 + $0x138] sm:$0xff]
    %v167 = vld [vmem:[#allocation5 + $0x140] sm:$0xff]
    %v168 = vld [vmem:[#allocation5 + $0x148] sm:$0xff]
    %v169 = vld [vmem:[#allocation5 + $0x150] sm:$0xff]
    %v170 = vld [vmem:[#allocation5 + $0x158] sm:$0xff]
    %v171 = vld [vmem:[#allocation5 + $0x160] sm:$0xff]
    %v172 = vld [vmem:[#allocation5 + $0x168] sm:$0xff]
    %v173 = vld [vmem:[#allocation5 + $0x170] sm:$0xff]
    %v174 = vld [vmem:[#allocation5 + $0x178] sm:$0xff]
    %v175 = vld [vmem:[#allocation5 + $0x180] sm:$0xff]
    %v176 = vld [vmem:[#allocation5 + $0x188] sm:$0xff]
    %v177 = vld [vmem:[#allocation5 + $0x190] sm:$0xff]
    %v178 = vld [vmem:[#allocation5 + $0x198] sm:$0xff]
    %v179 = vld [vmem:[#allocation5 + $0x1a0] sm:$0xff]
    %v180 = vld [vmem:[#allocation5 + $0x1a8] sm:$0xff]
    %v181 = vld [vmem:[#allocation5 + $0x1b0] sm:$0xff]
    %v182 = vld [vmem:[#allocation5 + $0x1b8] sm:$0xff]
    %v183 = vld [vmem:[#allocation5 + $0x1c0] sm:$0xff]
    %v184 = vld [vmem:[#allocation5 + $0x1c8] sm:$0xff]
    %v185 = vld [vmem:[#allocation5 + $0x1d0] sm:$0xff]
    %v186 = vld [vmem:[#allocation5 + $0x1d8] sm:$0xff]
    %v187 = vld [vmem:[#allocation5 + $0x1e0] sm:$0xff]
    %v188 = vld [vmem:[#allocation5 + $0x1e8] sm:$0xff]
    %v189 = vld [vmem:[#allocation5 + $0x1f0] sm:$0xff]
    %v190 = vld [vmem:[#allocation5 + $0x1f8] sm:$0xff]
    %v191 = vld [vmem:[#allocation5 + $0x200] sm:$0xff]
    %v192 = vld [vmem:[#allocation5 + $0x208] sm:$0xff]
    %v193 = vld [vmem:[#allocation5 + $0x210] sm:$0xff]
    %v194 = vld [vmem:[#allocation5 + $0x218] sm:$0xff]
    %v195 = vld [vmem:[#allocation5 + $0x220] sm:$0xff]
    %v196 = vld [vmem:[#allocation5 + $0x228] sm:$0xff]
    %v197 = vld [vmem:[#allocation5 + $0x230] sm:$0xff]
    %v198 = vld [vmem:[#allocation5 + $0x238] sm:$0xff]
    %v199 = vld [vmem:[#allocation5 + $0x240] sm:$0xff]
    %v200 = vld [vmem:[#allocation5 + $0x248] sm:$0xff]
    %v201 = vld [vmem:[#allocation5 + $0x250] sm:$0xff]
    %v202 = vld [vmem:[#allocation5 + $0x258] sm:$0xff]
    %v203 = vld [vmem:[#allocation5 + $0x260] sm:$0xff]
    %v204 = vld [vmem:[#allocation5 + $0x268] sm:$0xff]
    %v205 = vld [vmem:[#allocation5 + $0x270] sm:$0xff]
    %v206 = vld [vmem:[#allocation5 + $0x278] sm:$0xff]
    %v207 = vld [vmem:[#allocation5 + $0x280] sm:$0xff]
    %v208 = vld [vmem:[#allocation5 + $0x288] sm:$0xff]
    %v209 = vld [vmem:[#allocation5 + $0x290] sm:$0xff]
    %v210 = vld [vmem:[#allocation5 + $0x298] sm:$0xff]
    %v211 = vld [vmem:[#allocation5 + $0x2a0] sm:$0xff]
    %v212 = vld [vmem:[#allocation5 + $0x2a8] sm:$0xff]
    %v213 = vld [vmem:[#allocation5 + $0x2b0] sm:$0xff]
    %v214 = vld [vmem:[#allocation5 + $0x2b8] sm:$0xff]
    %v215 = vld [vmem:[#allocation5 + $0x2c0] sm:$0xff]
    %v216 = vld [vmem:[#allocation5 + $0x2c8] sm:$0xff]
    %v217 = vld [vmem:[#allocation5 + $0x2d0] sm:$0xff]
    %v218 = vld [vmem:[#allocation5 + $0x2d8] sm:$0xff]
    %v219 = vld [vmem:[#allocation5 + $0x2e0] sm:$0xff]
    %v220 = vld [vmem:[#allocation5 + $0x2e8] sm:$0xff]
    %v221 = vld [vmem:[#allocation5 + $0x2f0] sm:$0xff]
    %v222 = vld [vmem:[#allocation5 + $0x2f8] sm:$0xff]
    %v223 = vld [vmem:[#allocation5 + $0x300] sm:$0xff]
    %v224 = vld [vmem:[#allocation5 + $0x308] sm:$0xff]
    %v225 = vld [vmem:[#allocation5 + $0x310] sm:$0xff]
    %v226 = vld [vmem:[#allocation5 + $0x318] sm:$0xff]
    %v227 = vld [vmem:[#allocation5 + $0x320] sm:$0xff]
    %v228 = vld [vmem:[#allocation5 + $0x328] sm:$0xff]
    %v229 = vld [vmem:[#allocation5 + $0x330] sm:$0xff]
    %v230 = vld [vmem:[#allocation5 + $0x338] sm:$0xff]
    %v231 = vld [vmem:[#allocation5 + $0x340] sm:$0xff]
    %v232 = vld [vmem:[#allocation5 + $0x348] sm:$0xff]
    %v233 = vld [vmem:[#allocation5 + $0x350] sm:$0xff]
    %v234 = vld [vmem:[#allocation5 + $0x358] sm:$0xff]
    %v235 = vld [vmem:[#allocation5 + $0x360] sm:$0xff]
    %v236 = vld [vmem:[#allocation5 + $0x368] sm:$0xff]
    %v237 = vld [vmem:[#allocation5 + $0x370] sm:$0xff]
    %v238 = vld [vmem:[#allocation5 + $0x378] sm:$0xff]
    %v239 = vld [vmem:[#allocation5 + $0x380] sm:$0xff]
    %v240 = vld [vmem:[#allocation5 + $0x388] sm:$0xff]
    %v241 = vld [vmem:[#allocation5 + $0x390] sm:$0xff]
    %v242 = vld [vmem:[#allocation5 + $0x398] sm:$0xff]
    %v243 = vld [vmem:[#allocation5 + $0x3a0] sm:$0xff]
    %v244 = vld [vmem:[#allocation5 + $0x3a8] sm:$0xff]
    %v245 = vld [vmem:[#allocation5 + $0x3b0] sm:$0xff]
    %v246 = vld [vmem:[#allocation5 + $0x3b8] sm:$0xff]
    %v247 = vld [vmem:[#allocation5 + $0x3c0] sm:$0xff]
    %v248 = vld [vmem:[#allocation5 + $0x3c8] sm:$0xff]
    %v249 = vld [vmem:[#allocation5 + $0x3d0] sm:$0xff]
    %v250 = vld [vmem:[#allocation5 + $0x3d8] sm:$0xff]
    %v251 = vld [vmem:[#allocation5 + $0x3e0] sm:$0xff]
    %v252 = vld [vmem:[#allocation5 + $0x3e8] sm:$0xff]
    %v253 = vld [vmem:[#allocation5 + $0x3f0] sm:$0xff]
    %v254 = vld [vmem:[#allocation5 + $0x3f8] sm:$0xff]
    %v255 = vld [vmem:[#allocation5 + $0x400] sm:$0xff]
    %v256 = vld [vmem:[#allocation5 + $0x408] sm:$0xff]
    %v257 = vld [vmem:[#allocation5 + $0x410] sm:$0xff]
    %v258 = vld [vmem:[#allocation5 + $0x418] sm:$0xff]
    %v259 = vld [vmem:[#allocation5 + $0x420] sm:$0xff]
    %v260 = vld [vmem:[#allocation5 + $0x428] sm:$0xff]
    %v261 = vld [vmem:[#allocation5 + $0x430] sm:$0xff]
    %v262 = vld [vmem:[#allocation5 + $0x438] sm:$0xff]
    %v263 = vld [vmem:[#allocation5 + $0x440] sm:$0xff]
    %v264 = vld [vmem:[#allocation5 + $0x448] sm:$0xff]
    %v265 = vld [vmem:[#allocation5 + $0x450] sm:$0xff]
    %v266 = vld [vmem:[#allocation5 + $0x458] sm:$0xff]
    %v267 = vld [vmem:[#allocation5 + $0x460] sm:$0xff]
    %v268 = vld [vmem:[#allocation5 + $0x468] sm:$0xff]
    %v269 = vld [vmem:[#allocation5 + $0x470] sm:$0xff]
    %v270 = vld [vmem:[#allocation5 + $0x478] sm:$0xff]
    %v271 = vld [vmem:[#allocation5 + $0x480] sm:$0xff]
    %v272 = vld [vmem:[#allocation5 + $0x488] sm:$0xff]
    %v273 = vld [vmem:[#allocation5 + $0x490] sm:$0xff]
    %v274 = vld [vmem:[#allocation5 + $0x498] sm:$0xff]
    %v275 = vld [vmem:[#allocation5 + $0x4a0] sm:$0xff]
    %v276 = vld [vmem:[#allocation5 + $0x4a8] sm:$0xff]
    %v277 = vld [vmem:[#allocation5 + $0x4b0] sm:$0xff]
    %v278 = vld [vmem:[#allocation5 + $0x4b8] sm:$0xff]
    %v279 = vld [vmem:[#allocation5 + $0x4c0] sm:$0xff]
    %v280 = vld [vmem:[#allocation5 + $0x4c8] sm:$0xff]
    %v281 = vld [vmem:[#allocation5 + $0x4d0] sm:$0xff]
    %v282 = vld [vmem:[#allocation5 + $0x4d8] sm:$0xff]
    %v283 = vld [vmem:[#allocation5 + $0x4e0] sm:$0xff]
    %v284 = vld [vmem:[#allocation5 + $0x4e8] sm:$0xff]
    %v285 = vld [vmem:[#allocation5 + $0x4f0] sm:$0xff]
    %v286 = vld [vmem:[#allocation5 + $0x4f8] sm:$0xff]
    %v287 = vld [vmem:[#allocation5 + $0x500] sm:$0xff]
    %v288 = vld [vmem:[#allocation5 + $0x508] sm:$0xff]
    %v289 = vld [vmem:[#allocation5 + $0x510] sm:$0xff]
    %v290 = vld [vmem:[#allocation5 + $0x518] sm:$0xff]
    %v291 = vld [vmem:[#allocation5 + $0x520] sm:$0xff]
    %v292 = vld [vmem:[#allocation5 + $0x528] sm:$0xff]
    %v293 = vld [vmem:[#allocation5 + $0x530] sm:$0xff]
    %v294 = vld [vmem:[#allocation5 + $0x538] sm:$0xff]
    %v295 = vld [vmem:[#allocation5 + $0x540] sm:$0xff]
    %v296 = vld [vmem:[#allocation5 + $0x548] sm:$0xff]
    %v297 = vld [vmem:[#allocation5 + $0x550] sm:$0xff]
    %v298 = vld [vmem:[#allocation5 + $0x558] sm:$0xff]
    %v299 = vld [vmem:[#allocation5 + $0x560] sm:$0xff]
    %v300 = vld [vmem:[#allocation5 + $0x568] sm:$0xff]
    %v301 = vld [vmem:[#allocation5 + $0x570] sm:$0xff]
    %v302 = vld [vmem:[#allocation5 + $0x578] sm:$0xff]
    %v303 = vld [vmem:[#allocation5 + $0x580] sm:$0xff]
    %v304 = vld [vmem:[#allocation5 + $0x588] sm:$0xff]
    %v305 = vld [vmem:[#allocation5 + $0x590] sm:$0xff]
    %v306 = vld [vmem:[#allocation5 + $0x598] sm:$0xff]
    %v307 = vld [vmem:[#allocation5 + $0x5a0] sm:$0xff]
    %v308 = vld [vmem:[#allocation5 + $0x5a8] sm:$0xff]
    %v309 = vld [vmem:[#allocation5 + $0x5b0] sm:$0xff]
    %v310 = vld [vmem:[#allocation5 + $0x5b8] sm:$0xff]
    %v311 = vld [vmem:[#allocation5 + $0x5c0] sm:$0xff]
    %v312 = vld [vmem:[#allocation5 + $0x5c8] sm:$0xff]
    %v313 = vld [vmem:[#allocation5 + $0x5d0] sm:$0xff]
    %v314 = vld [vmem:[#allocation5 + $0x5d8] sm:$0xff]
    %v315 = vld [vmem:[#allocation5 + $0x5e0] sm:$0xff]
    %v316 = vld [vmem:[#allocation5 + $0x5e8] sm:$0xff]
    %v317 = vld [vmem:[#allocation5 + $0x5f0] sm:$0xff]
    %v318 = vld [vmem:[#allocation5 + $0x5f8] sm:$0xff]
    %v319 = vld [vmem:[#allocation5 + $0x600] sm:$0xff]
    %v320 = vld [vmem:[#allocation5 + $0x608] sm:$0xff]
    %v321 = vld [vmem:[#allocation5 + $0x610] sm:$0xff]
    %v322 = vld [vmem:[#allocation5 + $0x618] sm:$0xff]
    %v323 = vld [vmem:[#allocation5 + $0x620] sm:$0xff]
    %v324 = vld [vmem:[#allocation5 + $0x628] sm:$0xff]
    %v325 = vld [vmem:[#allocation5 + $0x630] sm:$0xff]
    %v326 = vld [vmem:[#allocation5 + $0x638] sm:$0xff]
    %v327 = vld [vmem:[#allocation5 + $0x640] sm:$0xff]
    %v328 = vld [vmem:[#allocation5 + $0x648] sm:$0xff]
    %v329 = vld [vmem:[#allocation5 + $0x650] sm:$0xff]
    %v330 = vld [vmem:[#allocation5 + $0x658] sm:$0xff]
    %v331 = vld [vmem:[#allocation5 + $0x660] sm:$0xff]
    %v332 = vld [vmem:[#allocation5 + $0x668] sm:$0xff]
    %v333 = vld [vmem:[#allocation5 + $0x670] sm:$0xff]
    %v334 = vld [vmem:[#allocation5 + $0x678] sm:$0xff]
    %v335 = vld [vmem:[#allocation5 + $0x680] sm:$0xff]
    %v336 = vld [vmem:[#allocation5 + $0x688] sm:$0xff]
    %v337 = vld [vmem:[#allocation5 + $0x690] sm:$0xff]
    %v338 = vld [vmem:[#allocation5 + $0x698] sm:$0xff]
    %v339 = vld [vmem:[#allocation5 + $0x6a0] sm:$0xff]
    %v340 = vld [vmem:[#allocation5 + $0x6a8] sm:$0xff]
    %v341 = vld [vmem:[#allocation5 + $0x6b0] sm:$0xff]
    %v342 = vld [vmem:[#allocation5 + $0x6b8] sm:$0xff]
    %v343 = vld [vmem:[#allocation5 + $0x6c0] sm:$0xff]
    %v344 = vld [vmem:[#allocation5 + $0x6c8] sm:$0xff]
    %v345 = vld [vmem:[#allocation5 + $0x6d0] sm:$0xff]
    %v346 = vld [vmem:[#allocation5 + $0x6d8] sm:$0xff]
    %v347 = vld [vmem:[#allocation5 + $0x6e0] sm:$0xff]
    %v348 = vld [vmem:[#allocation5 + $0x6e8] sm:$0xff]
    %v349 = vld [vmem:[#allocation5 + $0x6f0] sm:$0xff]
    %v350 = vld [vmem:[#allocation5 + $0x6f8] sm:$0xff]
    %v351 = vld [vmem:[#allocation5 + $0x700] sm:$0xff]
    %v352 = vld [vmem:[#allocation5 + $0x708] sm:$0xff]
    %v353 = vld [vmem:[#allocation5 + $0x710] sm:$0xff]
    %v354 = vld [vmem:[#allocation5 + $0x718] sm:$0xff]
    %v355 = vld [vmem:[#allocation5 + $0x720] sm:$0xff]
    %v356 = vld [vmem:[#allocation5 + $0x728] sm:$0xff]
    %v357 = vld [vmem:[#allocation5 + $0x730] sm:$0xff]
    %v358 = vld [vmem:[#allocation5 + $0x738] sm:$0xff]
    %v359 = vld [vmem:[#allocation5 + $0x740] sm:$0xff]
    %v360 = vld [vmem:[#allocation5 + $0x748] sm:$0xff]
    %v361 = vld [vmem:[#allocation5 + $0x750] sm:$0xff]
    %v362 = vld [vmem:[#allocation5 + $0x758] sm:$0xff]
    %v363 = vld [vmem:[#allocation5 + $0x760] sm:$0xff]
    %v364 = vld [vmem:[#allocation5 + $0x768] sm:$0xff]
    %v365 = vld [vmem:[#allocation5 + $0x770] sm:$0xff]
    %v366 = vld [vmem:[#allocation5 + $0x778] sm:$0xff]
    %v367 = vld [vmem:[#allocation5 + $0x780] sm:$0xff]
    %v368 = vld [vmem:[#allocation5 + $0x788] sm:$0xff]
    %v369 = vld [vmem:[#allocation5 + $0x790] sm:$0xff]
    %v370 = vld [vmem:[#allocation5 + $0x798] sm:$0xff]
    %v371 = vld [vmem:[#allocation5 + $0x7a0] sm:$0xff]
    %v372 = vld [vmem:[#allocation5 + $0x7a8] sm:$0xff]
    %v373 = vld [vmem:[#allocation5 + $0x7b0] sm:$0xff]
    %v374 = vld [vmem:[#allocation5 + $0x7b8] sm:$0xff]
    %v375 = vld [vmem:[#allocation5 + $0x7c0] sm:$0xff]
    %v376 = vld [vmem:[#allocation5 + $0x7c8] sm:$0xff]
    %v377 = vld [vmem:[#allocation5 + $0x7d0] sm:$0xff]
    %v378 = vld [vmem:[#allocation5 + $0x7d8] sm:$0xff]
    %v379 = vld [vmem:[#allocation5 + $0x7e0] sm:$0xff]
    %v380 = vld [vmem:[#allocation5 + $0x7e8] sm:$0xff]
    %v381 = vld [vmem:[#allocation5 + $0x7f0] sm:$0xff]
    %v382 = vld [vmem:[#allocation5 + $0x7f8] sm:$0xff]
    %v383 = vld [vmem:[#allocation5 + $0x800] sm:$0xff]
    %v384 = vld [vmem:[#allocation5 + $0x808] sm:$0xff]
    %v385 = vld [vmem:[#allocation5 + $0x810] sm:$0xff]
    %v386 = vld [vmem:[#allocation5 + $0x818] sm:$0xff]
    %v387 = vld [vmem:[#allocation5 + $0x820] sm:$0xff]
    %v388 = vld [vmem:[#allocation5 + $0x828] sm:$0xff]
    %v389 = vld [vmem:[#allocation5 + $0x830] sm:$0xff]
    %v390 = vld [vmem:[#allocation5 + $0x838] sm:$0xff]
    %v391 = vld [vmem:[#allocation5 + $0x840] sm:$0xff]
    %v392 = vld [vmem:[#allocation5 + $0x848] sm:$0xff]
    %v393 = vld [vmem:[#allocation5 + $0x850] sm:$0xff]
    %v394 = vld [vmem:[#allocation5 + $0x858] sm:$0xff]
    %v395 = vld [vmem:[#allocation5 + $0x860] sm:$0xff]
    %v396 = vld [vmem:[#allocation5 + $0x868] sm:$0xff]
    %v397 = vld [vmem:[#allocation5 + $0x870] sm:$0xff]
    %v398 = vld [vmem:[#allocation5 + $0x878] sm:$0xff]
    %v399 = vld [vmem:[#allocation5 + $0x880] sm:$0xff]
    %v400 = vld [vmem:[#allocation5 + $0x888] sm:$0xff]
    %v401 = vld [vmem:[#allocation5 + $0x890] sm:$0xff]
    %v402 = vld [vmem:[#allocation5 + $0x898] sm:$0xff]
    %v403 = vld [vmem:[#allocation5 + $0x8a0] sm:$0xff]
    %v404 = vld [vmem:[#allocation5 + $0x8a8] sm:$0xff]
    %v405 = vld [vmem:[#allocation5 + $0x8b0] sm:$0xff]
    %v406 = vld [vmem:[#allocation5 + $0x8b8] sm:$0xff]
    %v407 = vld [vmem:[#allocation5 + $0x8c0] sm:$0xff]
    %v408 = vld [vmem:[#allocation5 + $0x8c8] sm:$0xff]
    %v409 = vld [vmem:[#allocation5 + $0x8d0] sm:$0xff]
    %v410 = vld [vmem:[#allocation5 + $0x8d8] sm:$0xff]
    %v411 = vld [vmem:[#allocation5 + $0x8e0] sm:$0xff]
    %v412 = vld [vmem:[#allocation5 + $0x8e8] sm:$0xff]
    %v413 = vld [vmem:[#allocation5 + $0x8f0] sm:$0xff]
    %v414 = vld [vmem:[#allocation5 + $0x8f8] sm:$0xff]
    %v415 = vld [vmem:[#allocation5 + $0x900] sm:$0xff]
    %v416 = vld [vmem:[#allocation5 + $0x908] sm:$0xff]
    %v417 = vld [vmem:[#allocation5 + $0x910] sm:$0xff]
    %v418 = vld [vmem:[#allocation5 + $0x918] sm:$0xff]
    %v419 = vld [vmem:[#allocation5 + $0x920] sm:$0xff]
    %v420 = vld [vmem:[#allocation5 + $0x928] sm:$0xff]
    %v421 = vld [vmem:[#allocation5 + $0x930] sm:$0xff]
    %v422 = vld [vmem:[#allocation5 + $0x938] sm:$0xff]
    %v423 = vld [vmem:[#allocation5 + $0x940] sm:$0xff]
    %v424 = vld [vmem:[#allocation5 + $0x948] sm:$0xff]
    %v425 = vld [vmem:[#allocation5 + $0x950] sm:$0xff]
    %v426 = vld [vmem:[#allocation5 + $0x958] sm:$0xff]
    %v427 = vld [vmem:[#allocation5 + $0x960] sm:$0xff]
    %v428 = vld [vmem:[#allocation5 + $0x968] sm:$0xff]
    %v429 = vld [vmem:[#allocation5 + $0x970] sm:$0xff]
    %v430 = vld [vmem:[#allocation5 + $0x978] sm:$0xff]
    %v431 = vld [vmem:[#allocation5 + $0x980] sm:$0xff]
    %v432 = vld [vmem:[#allocation5 + $0x988] sm:$0xff]
    %v433 = vld [vmem:[#allocation5 + $0x990] sm:$0xff]
    %v434 = vld [vmem:[#allocation5 + $0x998] sm:$0xff]
    %v435 = vld [vmem:[#allocation5 + $0x9a0] sm:$0xff]
    %v436 = vld [vmem:[#allocation5 + $0x9a8] sm:$0xff]
    %v437 = vld [vmem:[#allocation5 + $0x9b0] sm:$0xff]
    %v438 = vld [vmem:[#allocation5 + $0x9b8] sm:$0xff]
    %v439 = vld [vmem:[#allocation5 + $0x9c0] sm:$0xff]
    %v440 = vld [vmem:[#allocation5 + $0x9c8] sm:$0xff]
    %v441 = vld [vmem:[#allocation5 + $0x9d0] sm:$0xff]
    %v442 = vld [vmem:[#allocation5 + $0x9d8] sm:$0xff]
    %v443 = vld [vmem:[#allocation5 + $0x9e0] sm:$0xff]
    %v444 = vld [vmem:[#allocation5 + $0x9e8] sm:$0xff]
    %v445 = vld [vmem:[#allocation5 + $0x9f0] sm:$0xff]
    %v446 = vld [vmem:[#allocation5 + $0x9f8] sm:$0xff]
    %v447 = vld [vmem:[#allocation5 + $0xa00] sm:$0xff]
    %v448 = vld [vmem:[#allocation5 + $0xa08] sm:$0xff]
    %v449 = vld [vmem:[#allocation5 + $0xa10] sm:$0xff]
    %v450 = vld [vmem:[#allocation5 + $0xa18] sm:$0xff]
    %v451 = vld [vmem:[#allocation5 + $0xa20] sm:$0xff]
    %v452 = vld [vmem:[#allocation5 + $0xa28] sm:$0xff]
    %v453 = vld [vmem:[#allocation5 + $0xa30] sm:$0xff]
    %v454 = vld [vmem:[#allocation5 + $0xa38] sm:$0xff]
    %v455 = vld [vmem:[#allocation5 + $0xa40] sm:$0xff]
    %v456 = vld [vmem:[#allocation5 + $0xa48] sm:$0xff]
    %v457 = vld [vmem:[#allocation5 + $0xa50] sm:$0xff]
    %v458 = vld [vmem:[#allocation5 + $0xa58] sm:$0xff]
    %v459 = vld [vmem:[#allocation5 + $0xa60] sm:$0xff]
    %v460 = vld [vmem:[#allocation5 + $0xa68] sm:$0xff]
    %v461 = vld [vmem:[#allocation5 + $0xa70] sm:$0xff]
    %v462 = vld [vmem:[#allocation5 + $0xa78] sm:$0xff]
    %v463 = vld [vmem:[#allocation5 + $0xa80] sm:$0xff]
    %v464 = vld [vmem:[#allocation5 + $0xa88] sm:$0xff]
    %v465 = vld [vmem:[#allocation5 + $0xa90] sm:$0xff]
    %v466 = vld [vmem:[#allocation5 + $0xa98] sm:$0xff]
    %v467 = vld [vmem:[#allocation5 + $0xaa0] sm:$0xff]
    %v468 = vld [vmem:[#allocation5 + $0xaa8] sm:$0xff]
    %v469 = vld [vmem:[#allocation5 + $0xab0] sm:$0xff]
    %v470 = vld [vmem:[#allocation5 + $0xab8] sm:$0xff]
    %v471 = vld [vmem:[#allocation5 + $0xac0] sm:$0xff]
    %v472 = vld [vmem:[#allocation5 + $0xac8] sm:$0xff]
    %v473 = vld [vmem:[#allocation5 + $0xad0] sm:$0xff]
    %v474 = vld [vmem:[#allocation5 + $0xad8] sm:$0xff]
    %v475 = vld [vmem:[#allocation5 + $0xae0] sm:$0xff]
    %v476 = vld [vmem:[#allocation5 + $0xae8] sm:$0xff]
    %v477 = vld [vmem:[#allocation5 + $0xaf0] sm:$0xff]
    %v478 = vld [vmem:[#allocation5 + $0xaf8] sm:$0xff]
    %v479 = vld [vmem:[#allocation5 + $0xb00] sm:$0xff]
    %v480 = vld [vmem:[#allocation5 + $0xb08] sm:$0xff]
    %v481 = vld [vmem:[#allocation5 + $0xb10] sm:$0xff]
    %v482 = vld [vmem:[#allocation5 + $0xb18] sm:$0xff]
    %v483 = vld [vmem:[#allocation5 + $0xb20] sm:$0xff]
    %v484 = vld [vmem:[#allocation5 + $0xb28] sm:$0xff]
    %v485 = vld [vmem:[#allocation5 + $0xb30] sm:$0xff]
    %v486 = vld [vmem:[#allocation5 + $0xb38] sm:$0xff]
    %v487 = vld [vmem:[#allocation5 + $0xb40] sm:$0xff]
    %v488 = vld [vmem:[#allocation5 + $0xb48] sm:$0xff]
    %v489 = vld [vmem:[#allocation5 + $0xb50] sm:$0xff]
    %v490 = vld [vmem:[#allocation5 + $0xb58] sm:$0xff]
    %v491 = vld [vmem:[#allocation5 + $0xb60] sm:$0xff]
    %v492 = vld [vmem:[#allocation5 + $0xb68] sm:$0xff]
    %v493 = vld [vmem:[#allocation5 + $0xb70] sm:$0xff]
    %v494 = vld [vmem:[#allocation5 + $0xb78] sm:$0xff]
    %v495 = vld [vmem:[#allocation5 + $0xb80] sm:$0xff]
    %v496 = vld [vmem:[#allocation5 + $0xb88] sm:$0xff]
    %v497 = vld [vmem:[#allocation5 + $0xb90] sm:$0xff]
    %v498 = vld [vmem:[#allocation5 + $0xb98] sm:$0xff]
    %v499 = vld [vmem:[#allocation5 + $0xba0] sm:$0xff]
    %v500 = vld [vmem:[#allocation5 + $0xba8] sm:$0xff]
    %v501 = vld [vmem:[#allocation5 + $0xbb0] sm:$0xff]
    %v502 = vld [vmem:[#allocation5 + $0xbb8] sm:$0xff]
    %v503 = vld [vmem:[#allocation5 + $0xbc0] sm:$0xff]
    %v504 = vld [vmem:[#allocation5 + $0xbc8] sm:$0xff]
    %v505 = vld [vmem:[#allocation5 + $0xbd0] sm:$0xff]
    %v506 = vld [vmem:[#allocation5 + $0xbd8] sm:$0xff]
    %v507 = vld [vmem:[#allocation5 + $0xbe0] sm:$0xff]
    %v508 = vld [vmem:[#allocation5 + $0xbe8] sm:$0xff]
    %v509 = vld [vmem:[#allocation5 + $0xbf0] sm:$0xff]
    %v510 = vld [vmem:[#allocation5 + $0xbf8] sm:$0xff]
    %v511 = vld [vmem:[#allocation7] sm:$0x3]
    %v513 = vlaneseq
    %v514 = vshrl.u32 %v513, 7
    %v515 = vsub.s32 0, %v514
    %v516 = vrot.slane %v511, %v515
    %v517 = vlaneseq
    %v518 = vshrl.u32 %v517, 7
    %v519 = vsub.s32 1, %v518
    %v520 = vrot.slane %v511, %v519
    %v535 = vunpack.c.l.b16 %v115
    %v536 = vunpack.c.h.b16 %v115
    %v537 = vunpack.c.l.b16 %v116
    %v538 = vunpack.c.h.b16 %v116
    %v539 = vunpack.c.l.b16 %v117
    %v540 = vunpack.c.h.b16 %v117
    %v541 = vunpack.c.l.b16 %v118
    %v542 = vunpack.c.h.b16 %v118
    %v543 = vunpack.c.l.b16 %v119
    %v544 = vunpack.c.h.b16 %v119
    %v545 = vunpack.c.l.b16 %v120
    %v546 = vunpack.c.h.b16 %v120
    %v547 = vunpack.c.l.b16 %v121
    %v548 = vunpack.c.h.b16 %v121
    %v549 = vunpack.c.l.b16 %v122
    %v550 = vunpack.c.h.b16 %v122
    %v551 = vunpack.c.l.b16 %v123
    %v552 = vunpack.c.h.b16 %v123
    %v553 = vunpack.c.l.b16 %v124
    %v554 = vunpack.c.h.b16 %v124
    %v555 = vunpack.c.l.b16 %v125
    %v556 = vunpack.c.h.b16 %v125
    %v557 = vunpack.c.l.b16 %v126
    %v558 = vunpack.c.h.b16 %v126
    %v559 = vpack.c.b16 %v535, %v535
    %v560 = vpack.c.b16 %v536, %v536
    %v561 = vpack.c.b16 %v537, %v537
    %v562 = vpack.c.b16 %v538, %v538
    %v563 = vpack.c.b16 %v539, %v539
    %v564 = vpack.c.b16 %v540, %v540
    %v565 = vpack.c.b16 %v541, %v541
    %v566 = vpack.c.b16 %v542, %v542
    %v567 = vpack.c.b16 %v543, %v543
    %v568 = vpack.c.b16 %v544, %v544
    %v569 = vpack.c.b16 %v545, %v545
    %v570 = vpack.c.b16 %v546, %v546
    %v571 = vpack.c.b16 %v547, %v547
    %v572 = vpack.c.b16 %v548, %v548
    %v573 = vpack.c.b16 %v549, %v549
    %v574 = vpack.c.b16 %v550, %v550
    %v575 = vpack.c.b16 %v551, %v551
    %v576 = vpack.c.b16 %v552, %v552
    %v577 = vpack.c.b16 %v553, %v553
    %v578 = vpack.c.b16 %v554, %v554
    %v579 = vpack.c.b16 %v555, %v555
    %v580 = vpack.c.b16 %v556, %v556
    %v581 = vpack.c.b16 %v557, %v557
    %v582 = vpack.c.b16 %v558, %v558
    %v991 = vunpack.c.l.b16 %v127
    %v992 = vunpack.c.h.b16 %v127
    %v993 = vunpack.c.l.b16 %v128
    %v994 = vunpack.c.h.b16 %v128
    %v995 = vunpack.c.l.b16 %v129
    %v996 = vunpack.c.h.b16 %v129
    %v997 = vunpack.c.l.b16 %v130
    %v998 = vunpack.c.h.b16 %v130
    %v999 = vunpack.c.l.b16 %v131
    %v1000 = vunpack.c.h.b16 %v131
    %v1001 = vunpack.c.l.b16 %v132
    %v1002 = vunpack.c.h.b16 %v132
    %v1003 = vunpack.c.l.b16 %v133
    %v1004 = vunpack.c.h.b16 %v133
    %v1005 = vunpack.c.l.b16 %v134
    %v1006 = vunpack.c.h.b16 %v134
    %v1007 = vunpack.c.l.b16 %v135
    %v1008 = vunpack.c.h.b16 %v135
    %v1009 = vunpack.c.l.b16 %v136
    %v1010 = vunpack.c.h.b16 %v136
    %v1011 = vunpack.c.l.b16 %v137
    %v1012 = vunpack.c.h.b16 %v137
    %v1013 = vunpack.c.l.b16 %v138
    %v1014 = vunpack.c.h.b16 %v138
    %v1015 = vunpack.c.l.b16 %v139
    %v1016 = vunpack.c.h.b16 %v139
    %v1017 = vunpack.c.l.b16 %v140
    %v1018 = vunpack.c.h.b16 %v140
    %v1019 = vunpack.c.l.b16 %v141
    %v1020 = vunpack.c.h.b16 %v141
    %v1021 = vunpack.c.l.b16 %v142
    %v1022 = vunpack.c.h.b16 %v142
    %v1023 = vunpack.c.l.b16 %v143
    %v1024 = vunpack.c.h.b16 %v143
    %v1025 = vunpack.c.l.b16 %v144
    %v1026 = vunpack.c.h.b16 %v144
    %v1027 = vunpack.c.l.b16 %v145
    %v1028 = vunpack.c.h.b16 %v145
    %v1029 = vunpack.c.l.b16 %v146
    %v1030 = vunpack.c.h.b16 %v146
    %v1031 = vunpack.c.l.b16 %v147
    %v1032 = vunpack.c.h.b16 %v147
    %v1033 = vunpack.c.l.b16 %v148
    %v1034 = vunpack.c.h.b16 %v148
    %v1035 = vunpack.c.l.b16 %v149
    %v1036 = vunpack.c.h.b16 %v149
    %v1037 = vunpack.c.l.b16 %v150
    %v1038 = vunpack.c.h.b16 %v150
    %v1039 = vunpack.c.l.b16 %v151
    %v1040 = vunpack.c.h.b16 %v151
    %v1041 = vunpack.c.l.b16 %v152
    %v1042 = vunpack.c.h.b16 %v152
    %v1043 = vunpack.c.l.b16 %v153
    %v1044 = vunpack.c.h.b16 %v153
    %v1045 = vunpack.c.l.b16 %v154
    %v1046 = vunpack.c.h.b16 %v154
    %v1047 = vunpack.c.l.b16 %v155
    %v1048 = vunpack.c.h.b16 %v155
    %v1049 = vunpack.c.l.b16 %v156
    %v1050 = vunpack.c.h.b16 %v156
    %v1051 = vunpack.c.l.b16 %v157
    %v1052 = vunpack.c.h.b16 %v157
    %v1053 = vunpack.c.l.b16 %v158
    %v1054 = vunpack.c.h.b16 %v158
    %v1055 = vunpack.c.l.b16 %v159
    %v1056 = vunpack.c.h.b16 %v159
    %v1057 = vunpack.c.l.b16 %v160
    %v1058 = vunpack.c.h.b16 %v160
    %v1059 = vunpack.c.l.b16 %v161
    %v1060 = vunpack.c.h.b16 %v161
    %v1061 = vunpack.c.l.b16 %v162
    %v1062 = vunpack.c.h.b16 %v162
    %v1063 = vunpack.c.l.b16 %v163
    %v1064 = vunpack.c.h.b16 %v163
    %v1065 = vunpack.c.l.b16 %v164
    %v1066 = vunpack.c.h.b16 %v164
    %v1067 = vunpack.c.l.b16 %v165
    %v1068 = vunpack.c.h.b16 %v165
    %v1069 = vunpack.c.l.b16 %v166
    %v1070 = vunpack.c.h.b16 %v166
    %v1071 = vunpack.c.l.b16 %v167
    %v1072 = vunpack.c.h.b16 %v167
    %v1073 = vunpack.c.l.b16 %v168
    %v1074 = vunpack.c.h.b16 %v168
    %v1075 = vunpack.c.l.b16 %v169
    %v1076 = vunpack.c.h.b16 %v169
    %v1077 = vunpack.c.l.b16 %v170
    %v1078 = vunpack.c.h.b16 %v170
    %v1079 = vunpack.c.l.b16 %v171
    %v1080 = vunpack.c.h.b16 %v171
    %v1081 = vunpack.c.l.b16 %v172
    %v1082 = vunpack.c.h.b16 %v172
    %v1083 = vunpack.c.l.b16 %v173
    %v1084 = vunpack.c.h.b16 %v173
    %v1085 = vunpack.c.l.b16 %v174
    %v1086 = vunpack.c.h.b16 %v174
    %v1087 = vunpack.c.l.b16 %v175
    %v1088 = vunpack.c.h.b16 %v175
    %v1089 = vunpack.c.l.b16 %v176
    %v1090 = vunpack.c.h.b16 %v176
    %v1091 = vunpack.c.l.b16 %v177
    %v1092 = vunpack.c.h.b16 %v177
    %v1093 = vunpack.c.l.b16 %v178
    %v1094 = vunpack.c.h.b16 %v178
    %v1095 = vunpack.c.l.b16 %v179
    %v1096 = vunpack.c.h.b16 %v179
    %v1097 = vunpack.c.l.b16 %v180
    %v1098 = vunpack.c.h.b16 %v180
    %v1099 = vunpack.c.l.b16 %v181
    %v1100 = vunpack.c.h.b16 %v181
    %v1101 = vunpack.c.l.b16 %v182
    %v1102 = vunpack.c.h.b16 %v182
    %v1103 = vunpack.c.l.b16 %v183
    %v1104 = vunpack.c.h.b16 %v183
    %v1105 = vunpack.c.l.b16 %v184
    %v1106 = vunpack.c.h.b16 %v184
    %v1107 = vunpack.c.l.b16 %v185
    %v1108 = vunpack.c.h.b16 %v185
    %v1109 = vunpack.c.l.b16 %v186
    %v1110 = vunpack.c.h.b16 %v186
    %v1111 = vunpack.c.l.b16 %v187
    %v1112 = vunpack.c.h.b16 %v187
    %v1113 = vunpack.c.l.b16 %v188
    %v1114 = vunpack.c.h.b16 %v188
    %v1115 = vunpack.c.l.b16 %v189
    %v1116 = vunpack.c.h.b16 %v189
    %v1117 = vunpack.c.l.b16 %v190
    %v1118 = vunpack.c.h.b16 %v190
    %v1119 = vunpack.c.l.b16 %v191
    %v1120 = vunpack.c.h.b16 %v191
    %v1121 = vunpack.c.l.b16 %v192
    %v1122 = vunpack.c.h.b16 %v192
    %v1123 = vunpack.c.l.b16 %v193
    %v1124 = vunpack.c.h.b16 %v193
    %v1125 = vunpack.c.l.b16 %v194
    %v1126 = vunpack.c.h.b16 %v194
    %v1127 = vunpack.c.l.b16 %v195
    %v1128 = vunpack.c.h.b16 %v195
    %v1129 = vunpack.c.l.b16 %v196
    %v1130 = vunpack.c.h.b16 %v196
    %v1131 = vunpack.c.l.b16 %v197
    %v1132 = vunpack.c.h.b16 %v197
    %v1133 = vunpack.c.l.b16 %v198
    %v1134 = vunpack.c.h.b16 %v198
    %v1135 = vunpack.c.l.b16 %v199
    %v1136 = vunpack.c.h.b16 %v199
    %v1137 = vunpack.c.l.b16 %v200
    %v1138 = vunpack.c.h.b16 %v200
    %v1139 = vunpack.c.l.b16 %v201
    %v1140 = vunpack.c.h.b16 %v201
    %v1141 = vunpack.c.l.b16 %v202
    %v1142 = vunpack.c.h.b16 %v202
    %v1143 = vunpack.c.l.b16 %v203
    %v1144 = vunpack.c.h.b16 %v203
    %v1145 = vunpack.c.l.b16 %v204
    %v1146 = vunpack.c.h.b16 %v204
    %v1147 = vunpack.c.l.b16 %v205
    %v1148 = vunpack.c.h.b16 %v205
    %v1149 = vunpack.c.l.b16 %v206
    %v1150 = vunpack.c.h.b16 %v206
    %v1151 = vunpack.c.l.b16 %v207
    %v1152 = vunpack.c.h.b16 %v207
    %v1153 = vunpack.c.l.b16 %v208
    %v1154 = vunpack.c.h.b16 %v208
    %v1155 = vunpack.c.l.b16 %v209
    %v1156 = vunpack.c.h.b16 %v209
    %v1157 = vunpack.c.l.b16 %v210
    %v1158 = vunpack.c.h.b16 %v210
    %v1159 = vunpack.c.l.b16 %v211
    %v1160 = vunpack.c.h.b16 %v211
    %v1161 = vunpack.c.l.b16 %v212
    %v1162 = vunpack.c.h.b16 %v212
    %v1163 = vunpack.c.l.b16 %v213
    %v1164 = vunpack.c.h.b16 %v213
    %v1165 = vunpack.c.l.b16 %v214
    %v1166 = vunpack.c.h.b16 %v214
    %v1167 = vunpack.c.l.b16 %v215
    %v1168 = vunpack.c.h.b16 %v215
    %v1169 = vunpack.c.l.b16 %v216
    %v1170 = vunpack.c.h.b16 %v216
    %v1171 = vunpack.c.l.b16 %v217
    %v1172 = vunpack.c.h.b16 %v217
    %v1173 = vunpack.c.l.b16 %v218
    %v1174 = vunpack.c.h.b16 %v218
    %v1175 = vunpack.c.l.b16 %v219
    %v1176 = vunpack.c.h.b16 %v219
    %v1177 = vunpack.c.l.b16 %v220
    %v1178 = vunpack.c.h.b16 %v220
    %v1179 = vunpack.c.l.b16 %v221
    %v1180 = vunpack.c.h.b16 %v221
    %v1181 = vunpack.c.l.b16 %v222
    %v1182 = vunpack.c.h.b16 %v222
    %v1183 = vunpack.c.l.b16 %v223
    %v1184 = vunpack.c.h.b16 %v223
    %v1185 = vunpack.c.l.b16 %v224
    %v1186 = vunpack.c.h.b16 %v224
    %v1187 = vunpack.c.l.b16 %v225
    %v1188 = vunpack.c.h.b16 %v225
    %v1189 = vunpack.c.l.b16 %v226
    %v1190 = vunpack.c.h.b16 %v226
    %v1191 = vunpack.c.l.b16 %v227
    %v1192 = vunpack.c.h.b16 %v227
    %v1193 = vunpack.c.l.b16 %v228
    %v1194 = vunpack.c.h.b16 %v228
    %v1195 = vunpack.c.l.b16 %v229
    %v1196 = vunpack.c.h.b16 %v229
    %v1197 = vunpack.c.l.b16 %v230
    %v1198 = vunpack.c.h.b16 %v230
    %v1199 = vunpack.c.l.b16 %v231
    %v1200 = vunpack.c.h.b16 %v231
    %v1201 = vunpack.c.l.b16 %v232
    %v1202 = vunpack.c.h.b16 %v232
    %v1203 = vunpack.c.l.b16 %v233
    %v1204 = vunpack.c.h.b16 %v233
    %v1205 = vunpack.c.l.b16 %v234
    %v1206 = vunpack.c.h.b16 %v234
    %v1207 = vunpack.c.l.b16 %v235
    %v1208 = vunpack.c.h.b16 %v235
    %v1209 = vunpack.c.l.b16 %v236
    %v1210 = vunpack.c.h.b16 %v236
    %v1211 = vunpack.c.l.b16 %v237
    %v1212 = vunpack.c.h.b16 %v237
    %v1213 = vunpack.c.l.b16 %v238
    %v1214 = vunpack.c.h.b16 %v238
    %v1215 = vunpack.c.l.b16 %v239
    %v1216 = vunpack.c.h.b16 %v239
    %v1217 = vunpack.c.l.b16 %v240
    %v1218 = vunpack.c.h.b16 %v240
    %v1219 = vunpack.c.l.b16 %v241
    %v1220 = vunpack.c.h.b16 %v241
    %v1221 = vunpack.c.l.b16 %v242
    %v1222 = vunpack.c.h.b16 %v242
    %v1223 = vunpack.c.l.b16 %v243
    %v1224 = vunpack.c.h.b16 %v243
    %v1225 = vunpack.c.l.b16 %v244
    %v1226 = vunpack.c.h.b16 %v244
    %v1227 = vunpack.c.l.b16 %v245
    %v1228 = vunpack.c.h.b16 %v245
    %v1229 = vunpack.c.l.b16 %v246
    %v1230 = vunpack.c.h.b16 %v246
    %v1231 = vunpack.c.l.b16 %v247
    %v1232 = vunpack.c.h.b16 %v247
    %v1233 = vunpack.c.l.b16 %v248
    %v1234 = vunpack.c.h.b16 %v248
    %v1235 = vunpack.c.l.b16 %v249
    %v1236 = vunpack.c.h.b16 %v249
    %v1237 = vunpack.c.l.b16 %v250
    %v1238 = vunpack.c.h.b16 %v250
    %v1239 = vunpack.c.l.b16 %v251
    %v1240 = vunpack.c.h.b16 %v251
    %v1241 = vunpack.c.l.b16 %v252
    %v1242 = vunpack.c.h.b16 %v252
    %v1243 = vunpack.c.l.b16 %v253
    %v1244 = vunpack.c.h.b16 %v253
    %v1245 = vunpack.c.l.b16 %v254
    %v1246 = vunpack.c.h.b16 %v254
    %v1247 = vunpack.c.l.b16 %v255
    %v1248 = vunpack.c.h.b16 %v255
    %v1249 = vunpack.c.l.b16 %v256
    %v1250 = vunpack.c.h.b16 %v256
    %v1251 = vunpack.c.l.b16 %v257
    %v1252 = vunpack.c.h.b16 %v257
    %v1253 = vunpack.c.l.b16 %v258
    %v1254 = vunpack.c.h.b16 %v258
    %v1255 = vunpack.c.l.b16 %v259
    %v1256 = vunpack.c.h.b16 %v259
    %v1257 = vunpack.c.l.b16 %v260
    %v1258 = vunpack.c.h.b16 %v260
    %v1259 = vunpack.c.l.b16 %v261
    %v1260 = vunpack.c.h.b16 %v261
    %v1261 = vunpack.c.l.b16 %v262
    %v1262 = vunpack.c.h.b16 %v262
    %v1263 = vunpack.c.l.b16 %v263
    %v1264 = vunpack.c.h.b16 %v263
    %v1265 = vunpack.c.l.b16 %v264
    %v1266 = vunpack.c.h.b16 %v264
    %v1267 = vunpack.c.l.b16 %v265
    %v1268 = vunpack.c.h.b16 %v265
    %v1269 = vunpack.c.l.b16 %v266
    %v1270 = vunpack.c.h.b16 %v266
    %v1271 = vunpack.c.l.b16 %v267
    %v1272 = vunpack.c.h.b16 %v267
    %v1273 = vunpack.c.l.b16 %v268
    %v1274 = vunpack.c.h.b16 %v268
    %v1275 = vunpack.c.l.b16 %v269
    %v1276 = vunpack.c.h.b16 %v269
    %v1277 = vunpack.c.l.b16 %v270
    %v1278 = vunpack.c.h.b16 %v270
    %v1279 = vunpack.c.l.b16 %v271
    %v1280 = vunpack.c.h.b16 %v271
    %v1281 = vunpack.c.l.b16 %v272
    %v1282 = vunpack.c.h.b16 %v272
    %v1283 = vunpack.c.l.b16 %v273
    %v1284 = vunpack.c.h.b16 %v273
    %v1285 = vunpack.c.l.b16 %v274
    %v1286 = vunpack.c.h.b16 %v274
    %v1287 = vunpack.c.l.b16 %v275
    %v1288 = vunpack.c.h.b16 %v275
    %v1289 = vunpack.c.l.b16 %v276
    %v1290 = vunpack.c.h.b16 %v276
    %v1291 = vunpack.c.l.b16 %v277
    %v1292 = vunpack.c.h.b16 %v277
    %v1293 = vunpack.c.l.b16 %v278
    %v1294 = vunpack.c.h.b16 %v278
    %v1295 = vunpack.c.l.b16 %v279
    %v1296 = vunpack.c.h.b16 %v279
    %v1297 = vunpack.c.l.b16 %v280
    %v1298 = vunpack.c.h.b16 %v280
    %v1299 = vunpack.c.l.b16 %v281
    %v1300 = vunpack.c.h.b16 %v281
    %v1301 = vunpack.c.l.b16 %v282
    %v1302 = vunpack.c.h.b16 %v282
    %v1303 = vunpack.c.l.b16 %v283
    %v1304 = vunpack.c.h.b16 %v283
    %v1305 = vunpack.c.l.b16 %v284
    %v1306 = vunpack.c.h.b16 %v284
    %v1307 = vunpack.c.l.b16 %v285
    %v1308 = vunpack.c.h.b16 %v285
    %v1309 = vunpack.c.l.b16 %v286
    %v1310 = vunpack.c.h.b16 %v286
    %v1311 = vunpack.c.l.b16 %v287
    %v1312 = vunpack.c.h.b16 %v287
    %v1313 = vunpack.c.l.b16 %v288
    %v1314 = vunpack.c.h.b16 %v288
    %v1315 = vunpack.c.l.b16 %v289
    %v1316 = vunpack.c.h.b16 %v289
    %v1317 = vunpack.c.l.b16 %v290
    %v1318 = vunpack.c.h.b16 %v290
    %v1319 = vunpack.c.l.b16 %v291
    %v1320 = vunpack.c.h.b16 %v291
    %v1321 = vunpack.c.l.b16 %v292
    %v1322 = vunpack.c.h.b16 %v292
    %v1323 = vunpack.c.l.b16 %v293
    %v1324 = vunpack.c.h.b16 %v293
    %v1325 = vunpack.c.l.b16 %v294
    %v1326 = vunpack.c.h.b16 %v294
    %v1327 = vunpack.c.l.b16 %v295
    %v1328 = vunpack.c.h.b16 %v295
    %v1329 = vunpack.c.l.b16 %v296
    %v1330 = vunpack.c.h.b16 %v296
    %v1331 = vunpack.c.l.b16 %v297
    %v1332 = vunpack.c.h.b16 %v297
    %v1333 = vunpack.c.l.b16 %v298
    %v1334 = vunpack.c.h.b16 %v298
    %v1335 = vunpack.c.l.b16 %v299
    %v1336 = vunpack.c.h.b16 %v299
    %v1337 = vunpack.c.l.b16 %v300
    %v1338 = vunpack.c.h.b16 %v300
    %v1339 = vunpack.c.l.b16 %v301
    %v1340 = vunpack.c.h.b16 %v301
    %v1341 = vunpack.c.l.b16 %v302
    %v1342 = vunpack.c.h.b16 %v302
    %v1343 = vunpack.c.l.b16 %v303
    %v1344 = vunpack.c.h.b16 %v303
    %v1345 = vunpack.c.l.b16 %v304
    %v1346 = vunpack.c.h.b16 %v304
    %v1347 = vunpack.c.l.b16 %v305
    %v1348 = vunpack.c.h.b16 %v305
    %v1349 = vunpack.c.l.b16 %v306
    %v1350 = vunpack.c.h.b16 %v306
    %v1351 = vunpack.c.l.b16 %v307
    %v1352 = vunpack.c.h.b16 %v307
    %v1353 = vunpack.c.l.b16 %v308
    %v1354 = vunpack.c.h.b16 %v308
    %v1355 = vunpack.c.l.b16 %v309
    %v1356 = vunpack.c.h.b16 %v309
    %v1357 = vunpack.c.l.b16 %v310
    %v1358 = vunpack.c.h.b16 %v310
    %v1359 = vunpack.c.l.b16 %v311
    %v1360 = vunpack.c.h.b16 %v311
    %v1361 = vunpack.c.l.b16 %v312
    %v1362 = vunpack.c.h.b16 %v312
    %v1363 = vunpack.c.l.b16 %v313
    %v1364 = vunpack.c.h.b16 %v313
    %v1365 = vunpack.c.l.b16 %v314
    %v1366 = vunpack.c.h.b16 %v314
    %v1367 = vunpack.c.l.b16 %v315
    %v1368 = vunpack.c.h.b16 %v315
    %v1369 = vunpack.c.l.b16 %v316
    %v1370 = vunpack.c.h.b16 %v316
    %v1371 = vunpack.c.l.b16 %v317
    %v1372 = vunpack.c.h.b16 %v317
    %v1373 = vunpack.c.l.b16 %v318
    %v1374 = vunpack.c.h.b16 %v318
    %v1375 = vunpack.c.l.b16 %v319
    %v1376 = vunpack.c.h.b16 %v319
    %v1377 = vunpack.c.l.b16 %v320
    %v1378 = vunpack.c.h.b16 %v320
    %v1379 = vunpack.c.l.b16 %v321
    %v1380 = vunpack.c.h.b16 %v321
    %v1381 = vunpack.c.l.b16 %v322
    %v1382 = vunpack.c.h.b16 %v322
    %v1383 = vunpack.c.l.b16 %v323
    %v1384 = vunpack.c.h.b16 %v323
    %v1385 = vunpack.c.l.b16 %v324
    %v1386 = vunpack.c.h.b16 %v324
    %v1387 = vunpack.c.l.b16 %v325
    %v1388 = vunpack.c.h.b16 %v325
    %v1389 = vunpack.c.l.b16 %v326
    %v1390 = vunpack.c.h.b16 %v326
    %v1391 = vunpack.c.l.b16 %v327
    %v1392 = vunpack.c.h.b16 %v327
    %v1393 = vunpack.c.l.b16 %v328
    %v1394 = vunpack.c.h.b16 %v328
    %v1395 = vunpack.c.l.b16 %v329
    %v1396 = vunpack.c.h.b16 %v329
    %v1397 = vunpack.c.l.b16 %v330
    %v1398 = vunpack.c.h.b16 %v330
    %v1399 = vunpack.c.l.b16 %v331
    %v1400 = vunpack.c.h.b16 %v331
    %v1401 = vunpack.c.l.b16 %v332
    %v1402 = vunpack.c.h.b16 %v332
    %v1403 = vunpack.c.l.b16 %v333
    %v1404 = vunpack.c.h.b16 %v333
    %v1405 = vunpack.c.l.b16 %v334
    %v1406 = vunpack.c.h.b16 %v334
    %v1407 = vunpack.c.l.b16 %v335
    %v1408 = vunpack.c.h.b16 %v335
    %v1409 = vunpack.c.l.b16 %v336
    %v1410 = vunpack.c.h.b16 %v336
    %v1411 = vunpack.c.l.b16 %v337
    %v1412 = vunpack.c.h.b16 %v337
    %v1413 = vunpack.c.l.b16 %v338
    %v1414 = vunpack.c.h.b16 %v338
    %v1415 = vunpack.c.l.b16 %v339
    %v1416 = vunpack.c.h.b16 %v339
    %v1417 = vunpack.c.l.b16 %v340
    %v1418 = vunpack.c.h.b16 %v340
    %v1419 = vunpack.c.l.b16 %v341
    %v1420 = vunpack.c.h.b16 %v341
    %v1421 = vunpack.c.l.b16 %v342
    %v1422 = vunpack.c.h.b16 %v342
    %v1423 = vunpack.c.l.b16 %v343
    %v1424 = vunpack.c.h.b16 %v343
    %v1425 = vunpack.c.l.b16 %v344
    %v1426 = vunpack.c.h.b16 %v344
    %v1427 = vunpack.c.l.b16 %v345
    %v1428 = vunpack.c.h.b16 %v345
    %v1429 = vunpack.c.l.b16 %v346
    %v1430 = vunpack.c.h.b16 %v346
    %v1431 = vunpack.c.l.b16 %v347
    %v1432 = vunpack.c.h.b16 %v347
    %v1433 = vunpack.c.l.b16 %v348
    %v1434 = vunpack.c.h.b16 %v348
    %v1435 = vunpack.c.l.b16 %v349
    %v1436 = vunpack.c.h.b16 %v349
    %v1437 = vunpack.c.l.b16 %v350
    %v1438 = vunpack.c.h.b16 %v350
    %v1439 = vunpack.c.l.b16 %v351
    %v1440 = vunpack.c.h.b16 %v351
    %v1441 = vunpack.c.l.b16 %v352
    %v1442 = vunpack.c.h.b16 %v352
    %v1443 = vunpack.c.l.b16 %v353
    %v1444 = vunpack.c.h.b16 %v353
    %v1445 = vunpack.c.l.b16 %v354
    %v1446 = vunpack.c.h.b16 %v354
    %v1447 = vunpack.c.l.b16 %v355
    %v1448 = vunpack.c.h.b16 %v355
    %v1449 = vunpack.c.l.b16 %v356
    %v1450 = vunpack.c.h.b16 %v356
    %v1451 = vunpack.c.l.b16 %v357
    %v1452 = vunpack.c.h.b16 %v357
    %v1453 = vunpack.c.l.b16 %v358
    %v1454 = vunpack.c.h.b16 %v358
    %v1455 = vunpack.c.l.b16 %v359
    %v1456 = vunpack.c.h.b16 %v359
    %v1457 = vunpack.c.l.b16 %v360
    %v1458 = vunpack.c.h.b16 %v360
    %v1459 = vunpack.c.l.b16 %v361
    %v1460 = vunpack.c.h.b16 %v361
    %v1461 = vunpack.c.l.b16 %v362
    %v1462 = vunpack.c.h.b16 %v362
    %v1463 = vunpack.c.l.b16 %v363
    %v1464 = vunpack.c.h.b16 %v363
    %v1465 = vunpack.c.l.b16 %v364
    %v1466 = vunpack.c.h.b16 %v364
    %v1467 = vunpack.c.l.b16 %v365
    %v1468 = vunpack.c.h.b16 %v365
    %v1469 = vunpack.c.l.b16 %v366
    %v1470 = vunpack.c.h.b16 %v366
    %v1471 = vunpack.c.l.b16 %v367
    %v1472 = vunpack.c.h.b16 %v367
    %v1473 = vunpack.c.l.b16 %v368
    %v1474 = vunpack.c.h.b16 %v368
    %v1475 = vunpack.c.l.b16 %v369
    %v1476 = vunpack.c.h.b16 %v369
    %v1477 = vunpack.c.l.b16 %v370
    %v1478 = vunpack.c.h.b16 %v370
    %v1479 = vunpack.c.l.b16 %v371
    %v1480 = vunpack.c.h.b16 %v371
    %v1481 = vunpack.c.l.b16 %v372
    %v1482 = vunpack.c.h.b16 %v372
    %v1483 = vunpack.c.l.b16 %v373
    %v1484 = vunpack.c.h.b16 %v373
    %v1485 = vunpack.c.l.b16 %v374
    %v1486 = vunpack.c.h.b16 %v374
    %v1487 = vunpack.c.l.b16 %v375
    %v1488 = vunpack.c.h.b16 %v375
    %v1489 = vunpack.c.l.b16 %v376
    %v1490 = vunpack.c.h.b16 %v376
    %v1491 = vunpack.c.l.b16 %v377
    %v1492 = vunpack.c.h.b16 %v377
    %v1493 = vunpack.c.l.b16 %v378
    %v1494 = vunpack.c.h.b16 %v378
    %v1495 = vunpack.c.l.b16 %v379
    %v1496 = vunpack.c.h.b16 %v379
    %v1497 = vunpack.c.l.b16 %v380
    %v1498 = vunpack.c.h.b16 %v380
    %v1499 = vunpack.c.l.b16 %v381
    %v1500 = vunpack.c.h.b16 %v381
    %v1501 = vunpack.c.l.b16 %v382
    %v1502 = vunpack.c.h.b16 %v382
    %v1503 = vunpack.c.l.b16 %v383
    %v1504 = vunpack.c.h.b16 %v383
    %v1505 = vunpack.c.l.b16 %v384
    %v1506 = vunpack.c.h.b16 %v384
    %v1507 = vunpack.c.l.b16 %v385
    %v1508 = vunpack.c.h.b16 %v385
    %v1509 = vunpack.c.l.b16 %v386
    %v1510 = vunpack.c.h.b16 %v386
    %v1511 = vunpack.c.l.b16 %v387
    %v1512 = vunpack.c.h.b16 %v387
    %v1513 = vunpack.c.l.b16 %v388
    %v1514 = vunpack.c.h.b16 %v388
    %v1515 = vunpack.c.l.b16 %v389
    %v1516 = vunpack.c.h.b16 %v389
    %v1517 = vunpack.c.l.b16 %v390
    %v1518 = vunpack.c.h.b16 %v390
    %v1519 = vunpack.c.l.b16 %v391
    %v1520 = vunpack.c.h.b16 %v391
    %v1521 = vunpack.c.l.b16 %v392
    %v1522 = vunpack.c.h.b16 %v392
    %v1523 = vunpack.c.l.b16 %v393
    %v1524 = vunpack.c.h.b16 %v393
    %v1525 = vunpack.c.l.b16 %v394
    %v1526 = vunpack.c.h.b16 %v394
    %v1527 = vunpack.c.l.b16 %v395
    %v1528 = vunpack.c.h.b16 %v395
    %v1529 = vunpack.c.l.b16 %v396
    %v1530 = vunpack.c.h.b16 %v396
    %v1531 = vunpack.c.l.b16 %v397
    %v1532 = vunpack.c.h.b16 %v397
    %v1533 = vunpack.c.l.b16 %v398
    %v1534 = vunpack.c.h.b16 %v398
    %v1535 = vunpack.c.l.b16 %v399
    %v1536 = vunpack.c.h.b16 %v399
    %v1537 = vunpack.c.l.b16 %v400
    %v1538 = vunpack.c.h.b16 %v400
    %v1539 = vunpack.c.l.b16 %v401
    %v1540 = vunpack.c.h.b16 %v401
    %v1541 = vunpack.c.l.b16 %v402
    %v1542 = vunpack.c.h.b16 %v402
    %v1543 = vunpack.c.l.b16 %v403
    %v1544 = vunpack.c.h.b16 %v403
    %v1545 = vunpack.c.l.b16 %v404
    %v1546 = vunpack.c.h.b16 %v404
    %v1547 = vunpack.c.l.b16 %v405
    %v1548 = vunpack.c.h.b16 %v405
    %v1549 = vunpack.c.l.b16 %v406
    %v1550 = vunpack.c.h.b16 %v406
    %v1551 = vunpack.c.l.b16 %v407
    %v1552 = vunpack.c.h.b16 %v407
    %v1553 = vunpack.c.l.b16 %v408
    %v1554 = vunpack.c.h.b16 %v408
    %v1555 = vunpack.c.l.b16 %v409
    %v1556 = vunpack.c.h.b16 %v409
    %v1557 = vunpack.c.l.b16 %v410
    %v1558 = vunpack.c.h.b16 %v410
    %v1559 = vunpack.c.l.b16 %v411
    %v1560 = vunpack.c.h.b16 %v411
    %v1561 = vunpack.c.l.b16 %v412
    %v1562 = vunpack.c.h.b16 %v412
    %v1563 = vunpack.c.l.b16 %v413
    %v1564 = vunpack.c.h.b16 %v413
    %v1565 = vunpack.c.l.b16 %v414
    %v1566 = vunpack.c.h.b16 %v414
    %v1567 = vunpack.c.l.b16 %v415
    %v1568 = vunpack.c.h.b16 %v415
    %v1569 = vunpack.c.l.b16 %v416
    %v1570 = vunpack.c.h.b16 %v416
    %v1571 = vunpack.c.l.b16 %v417
    %v1572 = vunpack.c.h.b16 %v417
    %v1573 = vunpack.c.l.b16 %v418
    %v1574 = vunpack.c.h.b16 %v418
    %v1575 = vunpack.c.l.b16 %v419
    %v1576 = vunpack.c.h.b16 %v419
    %v1577 = vunpack.c.l.b16 %v420
    %v1578 = vunpack.c.h.b16 %v420
    %v1579 = vunpack.c.l.b16 %v421
    %v1580 = vunpack.c.h.b16 %v421
    %v1581 = vunpack.c.l.b16 %v422
    %v1582 = vunpack.c.h.b16 %v422
    %v1583 = vunpack.c.l.b16 %v423
    %v1584 = vunpack.c.h.b16 %v423
    %v1585 = vunpack.c.l.b16 %v424
    %v1586 = vunpack.c.h.b16 %v424
    %v1587 = vunpack.c.l.b16 %v425
    %v1588 = vunpack.c.h.b16 %v425
    %v1589 = vunpack.c.l.b16 %v426
    %v1590 = vunpack.c.h.b16 %v426
    %v1591 = vunpack.c.l.b16 %v427
    %v1592 = vunpack.c.h.b16 %v427
    %v1593 = vunpack.c.l.b16 %v428
    %v1594 = vunpack.c.h.b16 %v428
    %v1595 = vunpack.c.l.b16 %v429
    %v1596 = vunpack.c.h.b16 %v429
    %v1597 = vunpack.c.l.b16 %v430
    %v1598 = vunpack.c.h.b16 %v430
    %v1599 = vunpack.c.l.b16 %v431
    %v1600 = vunpack.c.h.b16 %v431
    %v1601 = vunpack.c.l.b16 %v432
    %v1602 = vunpack.c.h.b16 %v432
    %v1603 = vunpack.c.l.b16 %v433
    %v1604 = vunpack.c.h.b16 %v433
    %v1605 = vunpack.c.l.b16 %v434
    %v1606 = vunpack.c.h.b16 %v434
    %v1607 = vunpack.c.l.b16 %v435
    %v1608 = vunpack.c.h.b16 %v435
    %v1609 = vunpack.c.l.b16 %v436
    %v1610 = vunpack.c.h.b16 %v436
    %v1611 = vunpack.c.l.b16 %v437
    %v1612 = vunpack.c.h.b16 %v437
    %v1613 = vunpack.c.l.b16 %v438
    %v1614 = vunpack.c.h.b16 %v438
    %v1615 = vunpack.c.l.b16 %v439
    %v1616 = vunpack.c.h.b16 %v439
    %v1617 = vunpack.c.l.b16 %v440
    %v1618 = vunpack.c.h.b16 %v440
    %v1619 = vunpack.c.l.b16 %v441
    %v1620 = vunpack.c.h.b16 %v441
    %v1621 = vunpack.c.l.b16 %v442
    %v1622 = vunpack.c.h.b16 %v442
    %v1623 = vunpack.c.l.b16 %v443
    %v1624 = vunpack.c.h.b16 %v443
    %v1625 = vunpack.c.l.b16 %v444
    %v1626 = vunpack.c.h.b16 %v444
    %v1627 = vunpack.c.l.b16 %v445
    %v1628 = vunpack.c.h.b16 %v445
    %v1629 = vunpack.c.l.b16 %v446
    %v1630 = vunpack.c.h.b16 %v446
    %v1631 = vunpack.c.l.b16 %v447
    %v1632 = vunpack.c.h.b16 %v447
    %v1633 = vunpack.c.l.b16 %v448
    %v1634 = vunpack.c.h.b16 %v448
    %v1635 = vunpack.c.l.b16 %v449
    %v1636 = vunpack.c.h.b16 %v449
    %v1637 = vunpack.c.l.b16 %v450
    %v1638 = vunpack.c.h.b16 %v450
    %v1639 = vunpack.c.l.b16 %v451
    %v1640 = vunpack.c.h.b16 %v451
    %v1641 = vunpack.c.l.b16 %v452
    %v1642 = vunpack.c.h.b16 %v452
    %v1643 = vunpack.c.l.b16 %v453
    %v1644 = vunpack.c.h.b16 %v453
    %v1645 = vunpack.c.l.b16 %v454
    %v1646 = vunpack.c.h.b16 %v454
    %v1647 = vunpack.c.l.b16 %v455
    %v1648 = vunpack.c.h.b16 %v455
    %v1649 = vunpack.c.l.b16 %v456
    %v1650 = vunpack.c.h.b16 %v456
    %v1651 = vunpack.c.l.b16 %v457
    %v1652 = vunpack.c.h.b16 %v457
    %v1653 = vunpack.c.l.b16 %v458
    %v1654 = vunpack.c.h.b16 %v458
    %v1655 = vunpack.c.l.b16 %v459
    %v1656 = vunpack.c.h.b16 %v459
    %v1657 = vunpack.c.l.b16 %v460
    %v1658 = vunpack.c.h.b16 %v460
    %v1659 = vunpack.c.l.b16 %v461
    %v1660 = vunpack.c.h.b16 %v461
    %v1661 = vunpack.c.l.b16 %v462
    %v1662 = vunpack.c.h.b16 %v462
    %v1663 = vunpack.c.l.b16 %v463
    %v1664 = vunpack.c.h.b16 %v463
    %v1665 = vunpack.c.l.b16 %v464
    %v1666 = vunpack.c.h.b16 %v464
    %v1667 = vunpack.c.l.b16 %v465
    %v1668 = vunpack.c.h.b16 %v465
    %v1669 = vunpack.c.l.b16 %v466
    %v1670 = vunpack.c.h.b16 %v466
    %v1671 = vunpack.c.l.b16 %v467
    %v1672 = vunpack.c.h.b16 %v467
    %v1673 = vunpack.c.l.b16 %v468
    %v1674 = vunpack.c.h.b16 %v468
    %v1675 = vunpack.c.l.b16 %v469
    %v1676 = vunpack.c.h.b16 %v469
    %v1677 = vunpack.c.l.b16 %v470
    %v1678 = vunpack.c.h.b16 %v470
    %v1679 = vunpack.c.l.b16 %v471
    %v1680 = vunpack.c.h.b16 %v471
    %v1681 = vunpack.c.l.b16 %v472
    %v1682 = vunpack.c.h.b16 %v472
    %v1683 = vunpack.c.l.b16 %v473
    %v1684 = vunpack.c.h.b16 %v473
    %v1685 = vunpack.c.l.b16 %v474
    %v1686 = vunpack.c.h.b16 %v474
    %v1687 = vunpack.c.l.b16 %v475
    %v1688 = vunpack.c.h.b16 %v475
    %v1689 = vunpack.c.l.b16 %v476
    %v1690 = vunpack.c.h.b16 %v476
    %v1691 = vunpack.c.l.b16 %v477
    %v1692 = vunpack.c.h.b16 %v477
    %v1693 = vunpack.c.l.b16 %v478
    %v1694 = vunpack.c.h.b16 %v478
    %v1695 = vunpack.c.l.b16 %v479
    %v1696 = vunpack.c.h.b16 %v479
    %v1697 = vunpack.c.l.b16 %v480
    %v1698 = vunpack.c.h.b16 %v480
    %v1699 = vunpack.c.l.b16 %v481
    %v1700 = vunpack.c.h.b16 %v481
    %v1701 = vunpack.c.l.b16 %v482
    %v1702 = vunpack.c.h.b16 %v482
    %v1703 = vunpack.c.l.b16 %v483
    %v1704 = vunpack.c.h.b16 %v483
    %v1705 = vunpack.c.l.b16 %v484
    %v1706 = vunpack.c.h.b16 %v484
    %v1707 = vunpack.c.l.b16 %v485
    %v1708 = vunpack.c.h.b16 %v485
    %v1709 = vunpack.c.l.b16 %v486
    %v1710 = vunpack.c.h.b16 %v486
    %v1711 = vunpack.c.l.b16 %v487
    %v1712 = vunpack.c.h.b16 %v487
    %v1713 = vunpack.c.l.b16 %v488
    %v1714 = vunpack.c.h.b16 %v488
    %v1715 = vunpack.c.l.b16 %v489
    %v1716 = vunpack.c.h.b16 %v489
    %v1717 = vunpack.c.l.b16 %v490
    %v1718 = vunpack.c.h.b16 %v490
    %v1719 = vunpack.c.l.b16 %v491
    %v1720 = vunpack.c.h.b16 %v491
    %v1721 = vunpack.c.l.b16 %v492
    %v1722 = vunpack.c.h.b16 %v492
    %v1723 = vunpack.c.l.b16 %v493
    %v1724 = vunpack.c.h.b16 %v493
    %v1725 = vunpack.c.l.b16 %v494
    %v1726 = vunpack.c.h.b16 %v494
    %v1727 = vunpack.c.l.b16 %v495
    %v1728 = vunpack.c.h.b16 %v495
    %v1729 = vunpack.c.l.b16 %v496
    %v1730 = vunpack.c.h.b16 %v496
    %v1731 = vunpack.c.l.b16 %v497
    %v1732 = vunpack.c.h.b16 %v497
    %v1733 = vunpack.c.l.b16 %v498
    %v1734 = vunpack.c.h.b16 %v498
    %v1735 = vunpack.c.l.b16 %v499
    %v1736 = vunpack.c.h.b16 %v499
    %v1737 = vunpack.c.l.b16 %v500
    %v1738 = vunpack.c.h.b16 %v500
    %v1739 = vunpack.c.l.b16 %v501
    %v1740 = vunpack.c.h.b16 %v501
    %v1741 = vunpack.c.l.b16 %v502
    %v1742 = vunpack.c.h.b16 %v502
    %v1743 = vunpack.c.l.b16 %v503
    %v1744 = vunpack.c.h.b16 %v503
    %v1745 = vunpack.c.l.b16 %v504
    %v1746 = vunpack.c.h.b16 %v504
    %v1747 = vunpack.c.l.b16 %v505
    %v1748 = vunpack.c.h.b16 %v505
    %v1749 = vunpack.c.l.b16 %v506
    %v1750 = vunpack.c.h.b16 %v506
    %v1751 = vunpack.c.l.b16 %v507
    %v1752 = vunpack.c.h.b16 %v507
    %v1753 = vunpack.c.l.b16 %v508
    %v1754 = vunpack.c.h.b16 %v508
    %v1755 = vunpack.c.l.b16 %v509
    %v1756 = vunpack.c.h.b16 %v509
    %v1757 = vunpack.c.l.b16 %v510
    %v1758 = vunpack.c.h.b16 %v510
    %v1759 = vpack.c.b16 %v993, %v991
    %v1760 = vpack.c.b16 %v994, %v992
    %v1761 = vpack.c.b16 %v997, %v995
    %v1762 = vpack.c.b16 %v998, %v996
    %v1763 = vpack.c.b16 %v1001, %v999
    %v1764 = vpack.c.b16 %v1002, %v1000
    %v1765 = vpack.c.b16 %v1005, %v1003
    %v1766 = vpack.c.b16 %v1006, %v1004
    %v1767 = vpack.c.b16 %v1009, %v1007
    %v1768 = vpack.c.b16 %v1010, %v1008
    %v1769 = vpack.c.b16 %v1013, %v1011
    %v1770 = vpack.c.b16 %v1014, %v1012
    %v1771 = vpack.c.b16 %v1017, %v1015
    %v1772 = vpack.c.b16 %v1018, %v1016
    %v1773 = vpack.c.b16 %v1021, %v1019
    %v1774 = vpack.c.b16 %v1022, %v1020
    %v1775 = vpack.c.b16 %v1025, %v1023
    %v1776 = vpack.c.b16 %v1026, %v1024
    %v1777 = vpack.c.b16 %v1029, %v1027
    %v1778 = vpack.c.b16 %v1030, %v1028
    %v1779 = vpack.c.b16 %v1033, %v1031
    %v1780 = vpack.c.b16 %v1034, %v1032
    %v1781 = vpack.c.b16 %v1037, %v1035
    %v1782 = vpack.c.b16 %v1038, %v1036
    %v1783 = vpack.c.b16 %v1041, %v1039
    %v1784 = vpack.c.b16 %v1042, %v1040
    %v1785 = vpack.c.b16 %v1045, %v1043
    %v1786 = vpack.c.b16 %v1046, %v1044
    %v1787 = vpack.c.b16 %v1049, %v1047
    %v1788 = vpack.c.b16 %v1050, %v1048
    %v1789 = vpack.c.b16 %v1053, %v1051
    %v1790 = vpack.c.b16 %v1054, %v1052
    %v1791 = vpack.c.b16 %v1057, %v1055
    %v1792 = vpack.c.b16 %v1058, %v1056
    %v1793 = vpack.c.b16 %v1061, %v1059
    %v1794 = vpack.c.b16 %v1062, %v1060
    %v1795 = vpack.c.b16 %v1065, %v1063
    %v1796 = vpack.c.b16 %v1066, %v1064
    %v1797 = vpack.c.b16 %v1069, %v1067
    %v1798 = vpack.c.b16 %v1070, %v1068
    %v1799 = vpack.c.b16 %v1073, %v1071
    %v1800 = vpack.c.b16 %v1074, %v1072
    %v1801 = vpack.c.b16 %v1077, %v1075
    %v1802 = vpack.c.b16 %v1078, %v1076
    %v1803 = vpack.c.b16 %v1081, %v1079
    %v1804 = vpack.c.b16 %v1082, %v1080
    %v1805 = vpack.c.b16 %v1085, %v1083
    %v1806 = vpack.c.b16 %v1086, %v1084
    %v1807 = vpack.c.b16 %v1089, %v1087
    %v1808 = vpack.c.b16 %v1090, %v1088
    %v1809 = vpack.c.b16 %v1093, %v1091
    %v1810 = vpack.c.b16 %v1094, %v1092
    %v1811 = vpack.c.b16 %v1097, %v1095
    %v1812 = vpack.c.b16 %v1098, %v1096
    %v1813 = vpack.c.b16 %v1101, %v1099
    %v1814 = vpack.c.b16 %v1102, %v1100
    %v1815 = vpack.c.b16 %v1105, %v1103
    %v1816 = vpack.c.b16 %v1106, %v1104
    %v1817 = vpack.c.b16 %v1109, %v1107
    %v1818 = vpack.c.b16 %v1110, %v1108
    %v1819 = vpack.c.b16 %v1113, %v1111
    %v1820 = vpack.c.b16 %v1114, %v1112
    %v1821 = vpack.c.b16 %v1117, %v1115
    %v1822 = vpack.c.b16 %v1118, %v1116
    %v1823 = vpack.c.b16 %v1121, %v1119
    %v1824 = vpack.c.b16 %v1122, %v1120
    %v1825 = vpack.c.b16 %v1125, %v1123
    %v1826 = vpack.c.b16 %v1126, %v1124
    %v1827 = vpack.c.b16 %v1129, %v1127
    %v1828 = vpack.c.b16 %v1130, %v1128
    %v1829 = vpack.c.b16 %v1133, %v1131
    %v1830 = vpack.c.b16 %v1134, %v1132
    %v1831 = vpack.c.b16 %v1137, %v1135
    %v1832 = vpack.c.b16 %v1138, %v1136
    %v1833 = vpack.c.b16 %v1141, %v1139
    %v1834 = vpack.c.b16 %v1142, %v1140
    %v1835 = vpack.c.b16 %v1145, %v1143
    %v1836 = vpack.c.b16 %v1146, %v1144
    %v1837 = vpack.c.b16 %v1149, %v1147
    %v1838 = vpack.c.b16 %v1150, %v1148
    %v1839 = vpack.c.b16 %v1153, %v1151
    %v1840 = vpack.c.b16 %v1154, %v1152
    %v1841 = vpack.c.b16 %v1157, %v1155
    %v1842 = vpack.c.b16 %v1158, %v1156
    %v1843 = vpack.c.b16 %v1161, %v1159
    %v1844 = vpack.c.b16 %v1162, %v1160
    %v1845 = vpack.c.b16 %v1165, %v1163
    %v1846 = vpack.c.b16 %v1166, %v1164
    %v1847 = vpack.c.b16 %v1169, %v1167
    %v1848 = vpack.c.b16 %v1170, %v1168
    %v1849 = vpack.c.b16 %v1173, %v1171
    %v1850 = vpack.c.b16 %v1174, %v1172
    %v1851 = vpack.c.b16 %v1177, %v1175
    %v1852 = vpack.c.b16 %v1178, %v1176
    %v1853 = vpack.c.b16 %v1181, %v1179
    %v1854 = vpack.c.b16 %v1182, %v1180
    %v1855 = vpack.c.b16 %v1185, %v1183
    %v1856 = vpack.c.b16 %v1186, %v1184
    %v1857 = vpack.c.b16 %v1189, %v1187
    %v1858 = vpack.c.b16 %v1190, %v1188
    %v1859 = vpack.c.b16 %v1193, %v1191
    %v1860 = vpack.c.b16 %v1194, %v1192
    %v1861 = vpack.c.b16 %v1197, %v1195
    %v1862 = vpack.c.b16 %v1198, %v1196
    %v1863 = vpack.c.b16 %v1201, %v1199
    %v1864 = vpack.c.b16 %v1202, %v1200
    %v1865 = vpack.c.b16 %v1205, %v1203
    %v1866 = vpack.c.b16 %v1206, %v1204
    %v1867 = vpack.c.b16 %v1209, %v1207
    %v1868 = vpack.c.b16 %v1210, %v1208
    %v1869 = vpack.c.b16 %v1213, %v1211
    %v1870 = vpack.c.b16 %v1214, %v1212
    %v1871 = vpack.c.b16 %v1217, %v1215
    %v1872 = vpack.c.b16 %v1218, %v1216
    %v1873 = vpack.c.b16 %v1221, %v1219
    %v1874 = vpack.c.b16 %v1222, %v1220
    %v1875 = vpack.c.b16 %v1225, %v1223
    %v1876 = vpack.c.b16 %v1226, %v1224
    %v1877 = vpack.c.b16 %v1229, %v1227
    %v1878 = vpack.c.b16 %v1230, %v1228
    %v1879 = vpack.c.b16 %v1233, %v1231
    %v1880 = vpack.c.b16 %v1234, %v1232
    %v1881 = vpack.c.b16 %v1237, %v1235
    %v1882 = vpack.c.b16 %v1238, %v1236
    %v1883 = vpack.c.b16 %v1241, %v1239
    %v1884 = vpack.c.b16 %v1242, %v1240
    %v1885 = vpack.c.b16 %v1245, %v1243
    %v1886 = vpack.c.b16 %v1246, %v1244
    %v1887 = vpack.c.b16 %v1249, %v1247
    %v1888 = vpack.c.b16 %v1250, %v1248
    %v1889 = vpack.c.b16 %v1253, %v1251
    %v1890 = vpack.c.b16 %v1254, %v1252
    %v1891 = vpack.c.b16 %v1257, %v1255
    %v1892 = vpack.c.b16 %v1258, %v1256
    %v1893 = vpack.c.b16 %v1261, %v1259
    %v1894 = vpack.c.b16 %v1262, %v1260
    %v1895 = vpack.c.b16 %v1265, %v1263
    %v1896 = vpack.c.b16 %v1266, %v1264
    %v1897 = vpack.c.b16 %v1269, %v1267
    %v1898 = vpack.c.b16 %v1270, %v1268
    %v1899 = vpack.c.b16 %v1273, %v1271
    %v1900 = vpack.c.b16 %v1274, %v1272
    %v1901 = vpack.c.b16 %v1277, %v1275
    %v1902 = vpack.c.b16 %v1278, %v1276
    %v1903 = vpack.c.b16 %v1281, %v1279
    %v1904 = vpack.c.b16 %v1282, %v1280
    %v1905 = vpack.c.b16 %v1285, %v1283
    %v1906 = vpack.c.b16 %v1286, %v1284
    %v1907 = vpack.c.b16 %v1289, %v1287
    %v1908 = vpack.c.b16 %v1290, %v1288
    %v1909 = vpack.c.b16 %v1293, %v1291
    %v1910 = vpack.c.b16 %v1294, %v1292
    %v1911 = vpack.c.b16 %v1297, %v1295
    %v1912 = vpack.c.b16 %v1298, %v1296
    %v1913 = vpack.c.b16 %v1301, %v1299
    %v1914 = vpack.c.b16 %v1302, %v1300
    %v1915 = vpack.c.b16 %v1305, %v1303
    %v1916 = vpack.c.b16 %v1306, %v1304
    %v1917 = vpack.c.b16 %v1309, %v1307
    %v1918 = vpack.c.b16 %v1310, %v1308
    %v1919 = vpack.c.b16 %v1313, %v1311
    %v1920 = vpack.c.b16 %v1314, %v1312
    %v1921 = vpack.c.b16 %v1317, %v1315
    %v1922 = vpack.c.b16 %v1318, %v1316
    %v1923 = vpack.c.b16 %v1321, %v1319
    %v1924 = vpack.c.b16 %v1322, %v1320
    %v1925 = vpack.c.b16 %v1325, %v1323
    %v1926 = vpack.c.b16 %v1326, %v1324
    %v1927 = vpack.c.b16 %v1329, %v1327
    %v1928 = vpack.c.b16 %v1330, %v1328
    %v1929 = vpack.c.b16 %v1333, %v1331
    %v1930 = vpack.c.b16 %v1334, %v1332
    %v1931 = vpack.c.b16 %v1337, %v1335
    %v1932 = vpack.c.b16 %v1338, %v1336
    %v1933 = vpack.c.b16 %v1341, %v1339
    %v1934 = vpack.c.b16 %v1342, %v1340
    %v1935 = vpack.c.b16 %v1345, %v1343
    %v1936 = vpack.c.b16 %v1346, %v1344
    %v1937 = vpack.c.b16 %v1349, %v1347
    %v1938 = vpack.c.b16 %v1350, %v1348
    %v1939 = vpack.c.b16 %v1353, %v1351
    %v1940 = vpack.c.b16 %v1354, %v1352
    %v1941 = vpack.c.b16 %v1357, %v1355
    %v1942 = vpack.c.b16 %v1358, %v1356
    %v1943 = vpack.c.b16 %v1361, %v1359
    %v1944 = vpack.c.b16 %v1362, %v1360
    %v1945 = vpack.c.b16 %v1365, %v1363
    %v1946 = vpack.c.b16 %v1366, %v1364
    %v1947 = vpack.c.b16 %v1369, %v1367
    %v1948 = vpack.c.b16 %v1370, %v1368
    %v1949 = vpack.c.b16 %v1373, %v1371
    %v1950 = vpack.c.b16 %v1374, %v1372
    %v1951 = vpack.c.b16 %v1377, %v1375
    %v1952 = vpack.c.b16 %v1378, %v1376
    %v1953 = vpack.c.b16 %v1381, %v1379
    %v1954 = vpack.c.b16 %v1382, %v1380
    %v1955 = vpack.c.b16 %v1385, %v1383
    %v1956 = vpack.c.b16 %v1386, %v1384
    %v1957 = vpack.c.b16 %v1389, %v1387
    %v1958 = vpack.c.b16 %v1390, %v1388
    %v1959 = vpack.c.b16 %v1393, %v1391
    %v1960 = vpack.c.b16 %v1394, %v1392
    %v1961 = vpack.c.b16 %v1397, %v1395
    %v1962 = vpack.c.b16 %v1398, %v1396
    %v1963 = vpack.c.b16 %v1401, %v1399
    %v1964 = vpack.c.b16 %v1402, %v1400
    %v1965 = vpack.c.b16 %v1405, %v1403
    %v1966 = vpack.c.b16 %v1406, %v1404
    %v1967 = vpack.c.b16 %v1409, %v1407
    %v1968 = vpack.c.b16 %v1410, %v1408
    %v1969 = vpack.c.b16 %v1413, %v1411
    %v1970 = vpack.c.b16 %v1414, %v1412
    %v1971 = vpack.c.b16 %v1417, %v1415
    %v1972 = vpack.c.b16 %v1418, %v1416
    %v1973 = vpack.c.b16 %v1421, %v1419
    %v1974 = vpack.c.b16 %v1422, %v1420
    %v1975 = vpack.c.b16 %v1425, %v1423
    %v1976 = vpack.c.b16 %v1426, %v1424
    %v1977 = vpack.c.b16 %v1429, %v1427
    %v1978 = vpack.c.b16 %v1430, %v1428
    %v1979 = vpack.c.b16 %v1433, %v1431
    %v1980 = vpack.c.b16 %v1434, %v1432
    %v1981 = vpack.c.b16 %v1437, %v1435
    %v1982 = vpack.c.b16 %v1438, %v1436
    %v1983 = vpack.c.b16 %v1441, %v1439
    %v1984 = vpack.c.b16 %v1442, %v1440
    %v1985 = vpack.c.b16 %v1445, %v1443
    %v1986 = vpack.c.b16 %v1446, %v1444
    %v1987 = vpack.c.b16 %v1449, %v1447
    %v1988 = vpack.c.b16 %v1450, %v1448
    %v1989 = vpack.c.b16 %v1453, %v1451
    %v1990 = vpack.c.b16 %v1454, %v1452
    %v1991 = vpack.c.b16 %v1457, %v1455
    %v1992 = vpack.c.b16 %v1458, %v1456
    %v1993 = vpack.c.b16 %v1461, %v1459
    %v1994 = vpack.c.b16 %v1462, %v1460
    %v1995 = vpack.c.b16 %v1465, %v1463
    %v1996 = vpack.c.b16 %v1466, %v1464
    %v1997 = vpack.c.b16 %v1469, %v1467
    %v1998 = vpack.c.b16 %v1470, %v1468
    %v1999 = vpack.c.b16 %v1473, %v1471
    %v2000 = vpack.c.b16 %v1474, %v1472
    %v2001 = vpack.c.b16 %v1477, %v1475
    %v2002 = vpack.c.b16 %v1478, %v1476
    %v2003 = vpack.c.b16 %v1481, %v1479
    %v2004 = vpack.c.b16 %v1482, %v1480
    %v2005 = vpack.c.b16 %v1485, %v1483
    %v2006 = vpack.c.b16 %v1486, %v1484
    %v2007 = vpack.c.b16 %v1489, %v1487
    %v2008 = vpack.c.b16 %v1490, %v1488
    %v2009 = vpack.c.b16 %v1493, %v1491
    %v2010 = vpack.c.b16 %v1494, %v1492
    %v2011 = vpack.c.b16 %v1497, %v1495
    %v2012 = vpack.c.b16 %v1498, %v1496
    %v2013 = vpack.c.b16 %v1501, %v1499
    %v2014 = vpack.c.b16 %v1502, %v1500
    %v2015 = vpack.c.b16 %v1505, %v1503
    %v2016 = vpack.c.b16 %v1506, %v1504
    %v2017 = vpack.c.b16 %v1509, %v1507
    %v2018 = vpack.c.b16 %v1510, %v1508
    %v2019 = vpack.c.b16 %v1513, %v1511
    %v2020 = vpack.c.b16 %v1514, %v1512
    %v2021 = vpack.c.b16 %v1517, %v1515
    %v2022 = vpack.c.b16 %v1518, %v1516
    %v2023 = vpack.c.b16 %v1521, %v1519
    %v2024 = vpack.c.b16 %v1522, %v1520
    %v2025 = vpack.c.b16 %v1525, %v1523
    %v2026 = vpack.c.b16 %v1526, %v1524
    %v2027 = vpack.c.b16 %v1529, %v1527
    %v2028 = vpack.c.b16 %v1530, %v1528
    %v2029 = vpack.c.b16 %v1533, %v1531
    %v2030 = vpack.c.b16 %v1534, %v1532
    %v2031 = vpack.c.b16 %v1537, %v1535
    %v2032 = vpack.c.b16 %v1538, %v1536
    %v2033 = vpack.c.b16 %v1541, %v1539
    %v2034 = vpack.c.b16 %v1542, %v1540
    %v2035 = vpack.c.b16 %v1545, %v1543
    %v2036 = vpack.c.b16 %v1546, %v1544
    %v2037 = vpack.c.b16 %v1549, %v1547
    %v2038 = vpack.c.b16 %v1550, %v1548
    %v2039 = vpack.c.b16 %v1553, %v1551
    %v2040 = vpack.c.b16 %v1554, %v1552
    %v2041 = vpack.c.b16 %v1557, %v1555
    %v2042 = vpack.c.b16 %v1558, %v1556
    %v2043 = vpack.c.b16 %v1561, %v1559
    %v2044 = vpack.c.b16 %v1562, %v1560
    %v2045 = vpack.c.b16 %v1565, %v1563
    %v2046 = vpack.c.b16 %v1566, %v1564
    %v2047 = vpack.c.b16 %v1569, %v1567
    %v2048 = vpack.c.b16 %v1570, %v1568
    %v2049 = vpack.c.b16 %v1573, %v1571
    %v2050 = vpack.c.b16 %v1574, %v1572
    %v2051 = vpack.c.b16 %v1577, %v1575
    %v2052 = vpack.c.b16 %v1578, %v1576
    %v2053 = vpack.c.b16 %v1581, %v1579
    %v2054 = vpack.c.b16 %v1582, %v1580
    %v2055 = vpack.c.b16 %v1585, %v1583
    %v2056 = vpack.c.b16 %v1586, %v1584
    %v2057 = vpack.c.b16 %v1589, %v1587
    %v2058 = vpack.c.b16 %v1590, %v1588
    %v2059 = vpack.c.b16 %v1593, %v1591
    %v2060 = vpack.c.b16 %v1594, %v1592
    %v2061 = vpack.c.b16 %v1597, %v1595
    %v2062 = vpack.c.b16 %v1598, %v1596
    %v2063 = vpack.c.b16 %v1601, %v1599
    %v2064 = vpack.c.b16 %v1602, %v1600
    %v2065 = vpack.c.b16 %v1605, %v1603
    %v2066 = vpack.c.b16 %v1606, %v1604
    %v2067 = vpack.c.b16 %v1609, %v1607
    %v2068 = vpack.c.b16 %v1610, %v1608
    %v2069 = vpack.c.b16 %v1613, %v1611
    %v2070 = vpack.c.b16 %v1614, %v1612
    %v2071 = vpack.c.b16 %v1617, %v1615
    %v2072 = vpack.c.b16 %v1618, %v1616
    %v2073 = vpack.c.b16 %v1621, %v1619
    %v2074 = vpack.c.b16 %v1622, %v1620
    %v2075 = vpack.c.b16 %v1625, %v1623
    %v2076 = vpack.c.b16 %v1626, %v1624
    %v2077 = vpack.c.b16 %v1629, %v1627
    %v2078 = vpack.c.b16 %v1630, %v1628
    %v2079 = vpack.c.b16 %v1633, %v1631
    %v2080 = vpack.c.b16 %v1634, %v1632
    %v2081 = vpack.c.b16 %v1637, %v1635
    %v2082 = vpack.c.b16 %v1638, %v1636
    %v2083 = vpack.c.b16 %v1641, %v1639
    %v2084 = vpack.c.b16 %v1642, %v1640
    %v2085 = vpack.c.b16 %v1645, %v1643
    %v2086 = vpack.c.b16 %v1646, %v1644
    %v2087 = vpack.c.b16 %v1649, %v1647
    %v2088 = vpack.c.b16 %v1650, %v1648
    %v2089 = vpack.c.b16 %v1653, %v1651
    %v2090 = vpack.c.b16 %v1654, %v1652
    %v2091 = vpack.c.b16 %v1657, %v1655
    %v2092 = vpack.c.b16 %v1658, %v1656
    %v2093 = vpack.c.b16 %v1661, %v1659
    %v2094 = vpack.c.b16 %v1662, %v1660
    %v2095 = vpack.c.b16 %v1665, %v1663
    %v2096 = vpack.c.b16 %v1666, %v1664
    %v2097 = vpack.c.b16 %v1669, %v1667
    %v2098 = vpack.c.b16 %v1670, %v1668
    %v2099 = vpack.c.b16 %v1673, %v1671
    %v2100 = vpack.c.b16 %v1674, %v1672
    %v2101 = vpack.c.b16 %v1677, %v1675
    %v2102 = vpack.c.b16 %v1678, %v1676
    %v2103 = vpack.c.b16 %v1681, %v1679
    %v2104 = vpack.c.b16 %v1682, %v1680
    %v2105 = vpack.c.b16 %v1685, %v1683
    %v2106 = vpack.c.b16 %v1686, %v1684
    %v2107 = vpack.c.b16 %v1689, %v1687
    %v2108 = vpack.c.b16 %v1690, %v1688
    %v2109 = vpack.c.b16 %v1693, %v1691
    %v2110 = vpack.c.b16 %v1694, %v1692
    %v2111 = vpack.c.b16 %v1697, %v1695
    %v2112 = vpack.c.b16 %v1698, %v1696
    %v2113 = vpack.c.b16 %v1701, %v1699
    %v2114 = vpack.c.b16 %v1702, %v1700
    %v2115 = vpack.c.b16 %v1705, %v1703
    %v2116 = vpack.c.b16 %v1706, %v1704
    %v2117 = vpack.c.b16 %v1709, %v1707
    %v2118 = vpack.c.b16 %v1710, %v1708
    %v2119 = vpack.c.b16 %v1713, %v1711
    %v2120 = vpack.c.b16 %v1714, %v1712
    %v2121 = vpack.c.b16 %v1717, %v1715
    %v2122 = vpack.c.b16 %v1718, %v1716
    %v2123 = vpack.c.b16 %v1721, %v1719
    %v2124 = vpack.c.b16 %v1722, %v1720
    %v2125 = vpack.c.b16 %v1725, %v1723
    %v2126 = vpack.c.b16 %v1726, %v1724
    %v2127 = vpack.c.b16 %v1729, %v1727
    %v2128 = vpack.c.b16 %v1730, %v1728
    %v2129 = vpack.c.b16 %v1733, %v1731
    %v2130 = vpack.c.b16 %v1734, %v1732
    %v2131 = vpack.c.b16 %v1737, %v1735
    %v2132 = vpack.c.b16 %v1738, %v1736
    %v2133 = vpack.c.b16 %v1741, %v1739
    %v2134 = vpack.c.b16 %v1742, %v1740
    %v2135 = vpack.c.b16 %v1745, %v1743
    %v2136 = vpack.c.b16 %v1746, %v1744
    %v2137 = vpack.c.b16 %v1749, %v1747
    %v2138 = vpack.c.b16 %v1750, %v1748
    %v2139 = vpack.c.b16 %v1753, %v1751
    %v2140 = vpack.c.b16 %v1754, %v1752
    %v2141 = vpack.c.b16 %v1757, %v1755
    %v2142 = vpack.c.b16 %v1758, %v1756
    %2527 = vmatprep.subr.bf16.mxu0 %v1760
    %2528 = vmatpush1.bf16.msra.mxu0 %v1759
    %2529 = vmatprep.subr.bf16.mxu0 %v1762
    %2530 = vmatpush1.bf16.msra.mxu0 %v1761
    %2531 = vmatprep.subr.bf16.mxu0 %v1764
    %2532 = vmatpush1.bf16.msra.mxu0 %v1763
    %2533 = vmatprep.subr.bf16.mxu0 %v1766
    %2534 = vmatpush1.bf16.msra.mxu0 %v1765
    %2535 = vmatprep.subr.bf16.mxu0 %v1768
    %2536 = vmatpush1.bf16.msra.mxu0 %v1767
    %2537 = vmatprep.subr.bf16.mxu0 %v1770
    %2538 = vmatpush1.bf16.msra.mxu0 %v1769
    %2539 = vmatprep.subr.bf16.mxu0 %v1772
    %2540 = vmatpush1.bf16.msra.mxu0 %v1771
    %2541 = vmatprep.subr.bf16.mxu0 %v1774
    %2542 = vmatpush1.bf16.msra.mxu0 %v1773
    %2543 = vmatprep.subr.bf16.mxu0 %v1776
    %2544 = vmatpush1.bf16.msra.mxu0 %v1775
    %2545 = vmatprep.subr.bf16.mxu0 %v1778
    %2546 = vmatpush1.bf16.msra.mxu0 %v1777
    %2547 = vmatprep.subr.bf16.mxu0 %v1780
    %2548 = vmatpush1.bf16.msra.mxu0 %v1779
    %2549 = vmatprep.subr.bf16.mxu0 %v1782
    %2550 = vmatpush1.bf16.msra.mxu0 %v1781
    %2551 = vmatprep.subr.bf16.mxu0 %v1784
    %2552 = vmatpush1.bf16.msra.mxu0 %v1783
    %2553 = vmatprep.subr.bf16.mxu0 %v1786
    %2554 = vmatpush1.bf16.msra.mxu0 %v1785
    %2555 = vmatprep.subr.bf16.mxu0 %v1788
    %2556 = vmatpush1.bf16.msra.mxu0 %v1787
    %2557 = vmatprep.subr.bf16.mxu0 %v1790
    %2558 = vmatpush1.bf16.msra.mxu0 %v1789
    %2559 = vmatprep.mubr.bf16.mxu0 %v560
    %2560 = vmatmul.mubr.bf16.gmra.mrb[0].mxu0 %v559
    %v2561 = vpop.f32.mrb[0].mxu0
    %v2562 = vadd.f32 %v516, %v2561
    %v2563 = vpop.f32.mrb[0].mxu0
    %v2564 = vadd.f32 %v520, %v2563
    %v2565 = vpop.f32.mrb[0].mxu0
    %v2566 = vpop.f32.mrb[0].mxu0
    %2567 = vdwg.mxu0
    %2568 = vmatprep.subr.bf16.mxu0 %v1792
    %2569 = vmatpush1.bf16.msra.mxu0 %v1791
    %2570 = vmatprep.subr.bf16.mxu0 %v1794
    %2571 = vmatpush1.bf16.msra.mxu0 %v1793
    %2572 = vmatprep.subr.bf16.mxu0 %v1796
    %2573 = vmatpush1.bf16.msra.mxu0 %v1795
    %2574 = vmatprep.subr.bf16.mxu0 %v1798
    %2575 = vmatpush1.bf16.msra.mxu0 %v1797
    %2576 = vmatprep.subr.bf16.mxu0 %v1800
    %2577 = vmatpush1.bf16.msra.mxu0 %v1799
    %2578 = vmatprep.subr.bf16.mxu0 %v1802
    %2579 = vmatpush1.bf16.msra.mxu0 %v1801
    %2580 = vmatprep.subr.bf16.mxu0 %v1804
    %2581 = vmatpush1.bf16.msra.mxu0 %v1803
    %2582 = vmatprep.subr.bf16.mxu0 %v1806
    %2583 = vmatpush1.bf16.msra.mxu0 %v1805
    %2584 = vmatprep.subr.bf16.mxu0 %v1808
    %2585 = vmatpush1.bf16.msra.mxu0 %v1807
    %2586 = vmatprep.subr.bf16.mxu0 %v1810
    %2587 = vmatpush1.bf16.msra.mxu0 %v1809
    %2588 = vmatprep.subr.bf16.mxu0 %v1812
    %2589 = vmatpush1.bf16.msra.mxu0 %v1811
    %2590 = vmatprep.subr.bf16.mxu0 %v1814
    %2591 = vmatpush1.bf16.msra.mxu0 %v1813
    %2592 = vmatprep.subr.bf16.mxu0 %v1816
    %2593 = vmatpush1.bf16.msra.mxu0 %v1815
    %2594 = vmatprep.subr.bf16.mxu0 %v1818
    %2595 = vmatpush1.bf16.msra.mxu0 %v1817
    %2596 = vmatprep.subr.bf16.mxu0 %v1820
    %2597 = vmatpush1.bf16.msra.mxu0 %v1819
    %2598 = vmatprep.subr.bf16.mxu0 %v1822
    %2599 = vmatpush1.bf16.msra.mxu0 %v1821
    %2600 = vmatprep.mubr.bf16.mxu0 %v562
    %2601 = vmatmul.mubr.bf16.gmra.mrb[0].mxu0 %v561
    %v2602 = vpop.f32.mrb[0].mxu0
    %v2603 = vadd.f32 %v2562, %v2602
    %v2604 = vpop.f32.mrb[0].mxu0
    %v2605 = vadd.f32 %v2564, %v2604
    %v2606 = vpop.f32.mrb[0].mxu0
    %v2607 = vpop.f32.mrb[0].mxu0
    %2608 = vdwg.mxu0
    %2609 = vmatprep.subr.bf16.mxu0 %v1824
    %2610 = vmatpush1.bf16.msra.mxu0 %v1823
    %2611 = vmatprep.subr.bf16.mxu0 %v1826
    %2612 = vmatpush1.bf16.msra.mxu0 %v1825
    %2613 = vmatprep.subr.bf16.mxu0 %v1828
    %2614 = vmatpush1.bf16.msra.mxu0 %v1827
    %2615 = vmatprep.subr.bf16.mxu0 %v1830
    %2616 = vmatpush1.bf16.msra.mxu0 %v1829
    %2617 = vmatprep.subr.bf16.mxu0 %v1832
    %2618 = vmatpush1.bf16.msra.mxu0 %v1831
    %2619 = vmatprep.subr.bf16.mxu0 %v1834
    %2620 = vmatpush1.bf16.msra.mxu0 %v1833
    %2621 = vmatprep.subr.bf16.mxu0 %v1836
    %2622 = vmatpush1.bf16.msra.mxu0 %v1835
    %2623 = vmatprep.subr.bf16.mxu0 %v1838
    %2624 = vmatpush1.bf16.msra.mxu0 %v1837
    %2625 = vmatprep.subr.bf16.mxu0 %v1840
    %2626 = vmatpush1.bf16.msra.mxu0 %v1839
    %2627 = vmatprep.subr.bf16.mxu0 %v1842
    %2628 = vmatpush1.bf16.msra.mxu0 %v1841
    %2629 = vmatprep.subr.bf16.mxu0 %v1844
    %2630 = vmatpush1.bf16.msra.mxu0 %v1843
    %2631 = vmatprep.subr.bf16.mxu0 %v1846
    %2632 = vmatpush1.bf16.msra.mxu0 %v1845
    %2633 = vmatprep.subr.bf16.mxu0 %v1848
    %2634 = vmatpush1.bf16.msra.mxu0 %v1847
    %2635 = vmatprep.subr.bf16.mxu0 %v1850
    %2636 = vmatpush1.bf16.msra.mxu0 %v1849
    %2637 = vmatprep.subr.bf16.mxu0 %v1852
    %2638 = vmatpush1.bf16.msra.mxu0 %v1851
    %2639 = vmatprep.subr.bf16.mxu0 %v1854
    %2640 = vmatpush1.bf16.msra.mxu0 %v1853
    %2641 = vmatprep.mubr.bf16.mxu0 %v564
    %2642 = vmatmul.mubr.bf16.gmra.mrb[0].mxu0 %v563
    %v2643 = vpop.f32.mrb[0].mxu0
    %v2644 = vadd.f32 %v2603, %v2643
    %v2645 = vpop.f32.mrb[0].mxu0
    %v2646 = vadd.f32 %v2605, %v2645
    %v2647 = vpop.f32.mrb[0].mxu0
    %v2648 = vpop.f32.mrb[0].mxu0
    %2649 = vdwg.mxu0
    %2650 = vmatprep.subr.bf16.mxu0 %v1856
    %2651 = vmatpush1.bf16.msra.mxu0 %v1855
    %2652 = vmatprep.subr.bf16.mxu0 %v1858
    %2653 = vmatpush1.bf16.msra.mxu0 %v1857
    %2654 = vmatprep.subr.bf16.mxu0 %v1860
    %2655 = vmatpush1.bf16.msra.mxu0 %v1859
    %2656 = vmatprep.subr.bf16.mxu0 %v1862
    %2657 = vmatpush1.bf16.msra.mxu0 %v1861
    %2658 = vmatprep.subr.bf16.mxu0 %v1864
    %2659 = vmatpush1.bf16.msra.mxu0 %v1863
    %2660 = vmatprep.subr.bf16.mxu0 %v1866
    %2661 = vmatpush1.bf16.msra.mxu0 %v1865
    %2662 = vmatprep.subr.bf16.mxu0 %v1868
    %2663 = vmatpush1.bf16.msra.mxu0 %v1867
    %2664 = vmatprep.subr.bf16.mxu0 %v1870
    %2665 = vmatpush1.bf16.msra.mxu0 %v1869
    %2666 = vmatprep.subr.bf16.mxu0 %v1872
    %2667 = vmatpush1.bf16.msra.mxu0 %v1871
    %2668 = vmatprep.subr.bf16.mxu0 %v1874
    %2669 = vmatpush1.bf16.msra.mxu0 %v1873
    %2670 = vmatprep.subr.bf16.mxu0 %v1876
    %2671 = vmatpush1.bf16.msra.mxu0 %v1875
    %2672 = vmatprep.subr.bf16.mxu0 %v1878
    %2673 = vmatpush1.bf16.msra.mxu0 %v1877
    %2674 = vmatprep.subr.bf16.mxu0 %v1880
    %2675 = vmatpush1.bf16.msra.mxu0 %v1879
    %2676 = vmatprep.subr.bf16.mxu0 %v1882
    %2677 = vmatpush1.bf16.msra.mxu0 %v1881
    %2678 = vmatprep.subr.bf16.mxu0 %v1884
    %2679 = vmatpush1.bf16.msra.mxu0 %v1883
    %2680 = vmatprep.subr.bf16.mxu0 %v1886
    %2681 = vmatpush1.bf16.msra.mxu0 %v1885
    %2682 = vmatprep.mubr.bf16.mxu0 %v566
    %2683 = vmatmul.mubr.bf16.gmra.mrb[0].mxu0 %v565
    %v2684 = vpop.f32.mrb[0].mxu0
    %v2685 = vadd.f32 %v2644, %v2684
    %v2686 = vpop.f32.mrb[0].mxu0
    %v2687 = vadd.f32 %v2646, %v2686
    %v2688 = vpop.f32.mrb[0].mxu0
    %v2689 = vpop.f32.mrb[0].mxu0
    %2690 = vdwg.mxu0
    %2691 = vmatprep.subr.bf16.mxu0 %v1888
    %2692 = vmatpush1.bf16.msra.mxu0 %v1887
    %2693 = vmatprep.subr.bf16.mxu0 %v1890
    %2694 = vmatpush1.bf16.msra.mxu0 %v1889
    %2695 = vmatprep.subr.bf16.mxu0 %v1892
    %2696 = vmatpush1.bf16.msra.mxu0 %v1891
    %2697 = vmatprep.subr.bf16.mxu0 %v1894
    %2698 = vmatpush1.bf16.msra.mxu0 %v1893
    %2699 = vmatprep.subr.bf16.mxu0 %v1896
    %2700 = vmatpush1.bf16.msra.mxu0 %v1895
    %2701 = vmatprep.subr.bf16.mxu0 %v1898
    %2702 = vmatpush1.bf16.msra.mxu0 %v1897
    %2703 = vmatprep.subr.bf16.mxu0 %v1900
    %2704 = vmatpush1.bf16.msra.mxu0 %v1899
    %2705 = vmatprep.subr.bf16.mxu0 %v1902
    %2706 = vmatpush1.bf16.msra.mxu0 %v1901
    %2707 = vmatprep.subr.bf16.mxu0 %v1904
    %2708 = vmatpush1.bf16.msra.mxu0 %v1903
    %2709 = vmatprep.subr.bf16.mxu0 %v1906
    %2710 = vmatpush1.bf16.msra.mxu0 %v1905
    %2711 = vmatprep.subr.bf16.mxu0 %v1908
    %2712 = vmatpush1.bf16.msra.mxu0 %v1907
    %2713 = vmatprep.subr.bf16.mxu0 %v1910
    %2714 = vmatpush1.bf16.msra.mxu0 %v1909
    %2715 = vmatprep.subr.bf16.mxu0 %v1912
    %2716 = vmatpush1.bf16.msra.mxu0 %v1911
    %2717 = vmatprep.subr.bf16.mxu0 %v1914
    %2718 = vmatpush1.bf16.msra.mxu0 %v1913
    %2719 = vmatprep.subr.bf16.mxu0 %v1916
    %2720 = vmatpush1.bf16.msra.mxu0 %v1915
    %2721 = vmatprep.subr.bf16.mxu0 %v1918
    %2722 = vmatpush1.bf16.msra.mxu0 %v1917
    %2723 = vmatprep.mubr.bf16.mxu0 %v568
    %2724 = vmatmul.mubr.bf16.gmra.mrb[0].mxu0 %v567
    %v2725 = vpop.f32.mrb[0].mxu0
    %v2726 = vadd.f32 %v2685, %v2725
    %v2727 = vpop.f32.mrb[0].mxu0
    %v2728 = vadd.f32 %v2687, %v2727
    %v2729 = vpop.f32.mrb[0].mxu0
    %v2730 = vpop.f32.mrb[0].mxu0
    %2731 = vdwg.mxu0
    %2732 = vmatprep.subr.bf16.mxu0 %v1920
    %2733 = vmatpush1.bf16.msra.mxu0 %v1919
    %2734 = vmatprep.subr.bf16.mxu0 %v1922
    %2735 = vmatpush1.bf16.msra.mxu0 %v1921
    %2736 = vmatprep.subr.bf16.mxu0 %v1924
    %2737 = vmatpush1.bf16.msra.mxu0 %v1923
    %2738 = vmatprep.subr.bf16.mxu0 %v1926
    %2739 = vmatpush1.bf16.msra.mxu0 %v1925
    %2740 = vmatprep.subr.bf16.mxu0 %v1928
    %2741 = vmatpush1.bf16.msra.mxu0 %v1927
    %2742 = vmatprep.subr.bf16.mxu0 %v1930
    %2743 = vmatpush1.bf16.msra.mxu0 %v1929
    %2744 = vmatprep.subr.bf16.mxu0 %v1932
    %2745 = vmatpush1.bf16.msra.mxu0 %v1931
    %2746 = vmatprep.subr.bf16.mxu0 %v1934
    %2747 = vmatpush1.bf16.msra.mxu0 %v1933
    %2748 = vmatprep.subr.bf16.mxu0 %v1936
    %2749 = vmatpush1.bf16.msra.mxu0 %v1935
    %2750 = vmatprep.subr.bf16.mxu0 %v1938
    %2751 = vmatpush1.bf16.msra.mxu0 %v1937
    %2752 = vmatprep.subr.bf16.mxu0 %v1940
    %2753 = vmatpush1.bf16.msra.mxu0 %v1939
    %2754 = vmatprep.subr.bf16.mxu0 %v1942
    %2755 = vmatpush1.bf16.msra.mxu0 %v1941
    %2756 = vmatprep.subr.bf16.mxu0 %v1944
    %2757 = vmatpush1.bf16.msra.mxu0 %v1943
    %2758 = vmatprep.subr.bf16.mxu0 %v1946
    %2759 = vmatpush1.bf16.msra.mxu0 %v1945
    %2760 = vmatprep.subr.bf16.mxu0 %v1948
    %2761 = vmatpush1.bf16.msra.mxu0 %v1947
    %2762 = vmatprep.subr.bf16.mxu0 %v1950
    %2763 = vmatpush1.bf16.msra.mxu0 %v1949
    %2764 = vmatprep.mubr.bf16.mxu0 %v570
    %2765 = vmatmul.mubr.bf16.gmra.mrb[0].mxu0 %v569
    %v2766 = vpop.f32.mrb[0].mxu0
    %v2767 = vadd.f32 %v2726, %v2766
    %v2768 = vpop.f32.mrb[0].mxu0
    %v2769 = vadd.f32 %v2728, %v2768
    %v2770 = vpop.f32.mrb[0].mxu0
    %v2771 = vpop.f32.mrb[0].mxu0
    %2772 = vdwg.mxu0
    %2773 = vmatprep.subr.bf16.mxu0 %v1952
    %2774 = vmatpush1.bf16.msra.mxu0 %v1951
    %2775 = vmatprep.subr.bf16.mxu0 %v1954
    %2776 = vmatpush1.bf16.msra.mxu0 %v1953
    %2777 = vmatprep.subr.bf16.mxu0 %v1956
    %2778 = vmatpush1.bf16.msra.mxu0 %v1955
    %2779 = vmatprep.subr.bf16.mxu0 %v1958
    %2780 = vmatpush1.bf16.msra.mxu0 %v1957
    %2781 = vmatprep.subr.bf16.mxu0 %v1960
    %2782 = vmatpush1.bf16.msra.mxu0 %v1959
    %2783 = vmatprep.subr.bf16.mxu0 %v1962
    %2784 = vmatpush1.bf16.msra.mxu0 %v1961
    %2785 = vmatprep.subr.bf16.mxu0 %v1964
    %2786 = vmatpush1.bf16.msra.mxu0 %v1963
    %2787 = vmatprep.subr.bf16.mxu0 %v1966
    %2788 = vmatpush1.bf16.msra.mxu0 %v1965
    %2789 = vmatprep.subr.bf16.mxu0 %v1968
    %2790 = vmatpush1.bf16.msra.mxu0 %v1967
    %2791 = vmatprep.subr.bf16.mxu0 %v1970
    %2792 = vmatpush1.bf16.msra.mxu0 %v1969
    %2793 = vmatprep.subr.bf16.mxu0 %v1972
    %2794 = vmatpush1.bf16.msra.mxu0 %v1971
    %2795 = vmatprep.subr.bf16.mxu0 %v1974
    %2796 = vmatpush1.bf16.msra.mxu0 %v1973
    %2797 = vmatprep.subr.bf16.mxu0 %v1976
    %2798 = vmatpush1.bf16.msra.mxu0 %v1975
    %2799 = vmatprep.subr.bf16.mxu0 %v1978
    %2800 = vmatpush1.bf16.msra.mxu0 %v1977
    %2801 = vmatprep.subr.bf16.mxu0 %v1980
    %2802 = vmatpush1.bf16.msra.mxu0 %v1979
    %2803 = vmatprep.subr.bf16.mxu0 %v1982
    %2804 = vmatpush1.bf16.msra.mxu0 %v1981
    %2805 = vmatprep.mubr.bf16.mxu0 %v572
    %2806 = vmatmul.mubr.bf16.gmra.mrb[0].mxu0 %v571
    %v2807 = vpop.f32.mrb[0].mxu0
    %v2808 = vadd.f32 %v2767, %v2807
    %v2809 = vpop.f32.mrb[0].mxu0
    %v2810 = vadd.f32 %v2769, %v2809
    %v2811 = vpop.f32.mrb[0].mxu0
    %v2812 = vpop.f32.mrb[0].mxu0
    %2813 = vdwg.mxu0
    %2814 = vmatprep.subr.bf16.mxu0 %v1984
    %2815 = vmatpush1.bf16.msra.mxu0 %v1983
    %2816 = vmatprep.subr.bf16.mxu0 %v1986
    %2817 = vmatpush1.bf16.msra.mxu0 %v1985
    %2818 = vmatprep.subr.bf16.mxu0 %v1988
    %2819 = vmatpush1.bf16.msra.mxu0 %v1987
    %2820 = vmatprep.subr.bf16.mxu0 %v1990
    %2821 = vmatpush1.bf16.msra.mxu0 %v1989
    %2822 = vmatprep.subr.bf16.mxu0 %v1992
    %2823 = vmatpush1.bf16.msra.mxu0 %v1991
    %2824 = vmatprep.subr.bf16.mxu0 %v1994
    %2825 = vmatpush1.bf16.msra.mxu0 %v1993
    %2826 = vmatprep.subr.bf16.mxu0 %v1996
    %2827 = vmatpush1.bf16.msra.mxu0 %v1995
    %2828 = vmatprep.subr.bf16.mxu0 %v1998
    %2829 = vmatpush1.bf16.msra.mxu0 %v1997
    %2830 = vmatprep.subr.bf16.mxu0 %v2000
    %2831 = vmatpush1.bf16.msra.mxu0 %v1999
    %2832 = vmatprep.subr.bf16.mxu0 %v2002
    %2833 = vmatpush1.bf16.msra.mxu0 %v2001
    %2834 = vmatprep.subr.bf16.mxu0 %v2004
    %2835 = vmatpush1.bf16.msra.mxu0 %v2003
    %2836 = vmatprep.subr.bf16.mxu0 %v2006
    %2837 = vmatpush1.bf16.msra.mxu0 %v2005
    %2838 = vmatprep.subr.bf16.mxu0 %v2008
    %2839 = vmatpush1.bf16.msra.mxu0 %v2007
    %2840 = vmatprep.subr.bf16.mxu0 %v2010
    %2841 = vmatpush1.bf16.msra.mxu0 %v2009
    %2842 = vmatprep.subr.bf16.mxu0 %v2012
    %2843 = vmatpush1.bf16.msra.mxu0 %v2011
    %2844 = vmatprep.subr.bf16.mxu0 %v2014
    %2845 = vmatpush1.bf16.msra.mxu0 %v2013
    %2846 = vmatprep.mubr.bf16.mxu0 %v574
    %2847 = vmatmul.mubr.bf16.gmra.mrb[0].mxu0 %v573
    %v2848 = vpop.f32.mrb[0].mxu0
    %v2849 = vadd.f32 %v2808, %v2848
    %v2850 = vpop.f32.mrb[0].mxu0
    %v2851 = vadd.f32 %v2810, %v2850
    %v2852 = vpop.f32.mrb[0].mxu0
    %v2853 = vpop.f32.mrb[0].mxu0
    %2854 = vdwg.mxu0
    %2855 = vmatprep.subr.bf16.mxu0 %v2016
    %2856 = vmatpush1.bf16.msra.mxu0 %v2015
    %2857 = vmatprep.subr.bf16.mxu0 %v2018
    %2858 = vmatpush1.bf16.msra.mxu0 %v2017
    %2859 = vmatprep.subr.bf16.mxu0 %v2020
    %2860 = vmatpush1.bf16.msra.mxu0 %v2019
    %2861 = vmatprep.subr.bf16.mxu0 %v2022
    %2862 = vmatpush1.bf16.msra.mxu0 %v2021
    %2863 = vmatprep.subr.bf16.mxu0 %v2024
    %2864 = vmatpush1.bf16.msra.mxu0 %v2023
    %2865 = vmatprep.subr.bf16.mxu0 %v2026
    %2866 = vmatpush1.bf16.msra.mxu0 %v2025
    %2867 = vmatprep.subr.bf16.mxu0 %v2028
    %2868 = vmatpush1.bf16.msra.mxu0 %v2027
    %2869 = vmatprep.subr.bf16.mxu0 %v2030
    %2870 = vmatpush1.bf16.msra.mxu0 %v2029
    %2871 = vmatprep.subr.bf16.mxu0 %v2032
    %2872 = vmatpush1.bf16.msra.mxu0 %v2031
    %2873 = vmatprep.subr.bf16.mxu0 %v2034
    %2874 = vmatpush1.bf16.msra.mxu0 %v2033
    %2875 = vmatprep.subr.bf16.mxu0 %v2036
    %2876 = vmatpush1.bf16.msra.mxu0 %v2035
    %2877 = vmatprep.subr.bf16.mxu0 %v2038
    %2878 = vmatpush1.bf16.msra.mxu0 %v2037
    %2879 = vmatprep.subr.bf16.mxu0 %v2040
    %2880 = vmatpush1.bf16.msra.mxu0 %v2039
    %2881 = vmatprep.subr.bf16.mxu0 %v2042
    %2882 = vmatpush1.bf16.msra.mxu0 %v2041
    %2883 = vmatprep.subr.bf16.mxu0 %v2044
    %2884 = vmatpush1.bf16.msra.mxu0 %v2043
    %2885 = vmatprep.subr.bf16.mxu0 %v2046
    %2886 = vmatpush1.bf16.msra.mxu0 %v2045
    %2887 = vmatprep.mubr.bf16.mxu0 %v576
    %2888 = vmatmul.mubr.bf16.gmra.mrb[0].mxu0 %v575
    %v2889 = vpop.f32.mrb[0].mxu0
    %v2890 = vadd.f32 %v2849, %v2889
    %v2891 = vpop.f32.mrb[0].mxu0
    %v2892 = vadd.f32 %v2851, %v2891
    %v2893 = vpop.f32.mrb[0].mxu0
    %v2894 = vpop.f32.mrb[0].mxu0
    %2895 = vdwg.mxu0
    %2896 = vmatprep.subr.bf16.mxu0 %v2048
    %2897 = vmatpush1.bf16.msra.mxu0 %v2047
    %2898 = vmatprep.subr.bf16.mxu0 %v2050
    %2899 = vmatpush1.bf16.msra.mxu0 %v2049
    %2900 = vmatprep.subr.bf16.mxu0 %v2052
    %2901 = vmatpush1.bf16.msra.mxu0 %v2051
    %2902 = vmatprep.subr.bf16.mxu0 %v2054
    %2903 = vmatpush1.bf16.msra.mxu0 %v2053
    %2904 = vmatprep.subr.bf16.mxu0 %v2056
    %2905 = vmatpush1.bf16.msra.mxu0 %v2055
    %2906 = vmatprep.subr.bf16.mxu0 %v2058
    %2907 = vmatpush1.bf16.msra.mxu0 %v2057
    %2908 = vmatprep.subr.bf16.mxu0 %v2060
    %2909 = vmatpush1.bf16.msra.mxu0 %v2059
    %2910 = vmatprep.subr.bf16.mxu0 %v2062
    %2911 = vmatpush1.bf16.msra.mxu0 %v2061
    %2912 = vmatprep.subr.bf16.mxu0 %v2064
    %2913 = vmatpush1.bf16.msra.mxu0 %v2063
    %2914 = vmatprep.subr.bf16.mxu0 %v2066
    %2915 = vmatpush1.bf16.msra.mxu0 %v2065
    %2916 = vmatprep.subr.bf16.mxu0 %v2068
    %2917 = vmatpush1.bf16.msra.mxu0 %v2067
    %2918 = vmatprep.subr.bf16.mxu0 %v2070
    %2919 = vmatpush1.bf16.msra.mxu0 %v2069
    %2920 = vmatprep.subr.bf16.mxu0 %v2072
    %2921 = vmatpush1.bf16.msra.mxu0 %v2071
    %2922 = vmatprep.subr.bf16.mxu0 %v2074
    %2923 = vmatpush1.bf16.msra.mxu0 %v2073
    %2924 = vmatprep.subr.bf16.mxu0 %v2076
    %2925 = vmatpush1.bf16.msra.mxu0 %v2075
    %2926 = vmatprep.subr.bf16.mxu0 %v2078
    %2927 = vmatpush1.bf16.msra.mxu0 %v2077
    %2928 = vmatprep.mubr.bf16.mxu0 %v578
    %2929 = vmatmul.mubr.bf16.gmra.mrb[0].mxu0 %v577
    %v2930 = vpop.f32.mrb[0].mxu0
    %v2931 = vadd.f32 %v2890, %v2930
    %v2932 = vpop.f32.mrb[0].mxu0
    %v2933 = vadd.f32 %v2892, %v2932
    %v2934 = vpop.f32.mrb[0].mxu0
    %v2935 = vpop.f32.mrb[0].mxu0
    %2936 = vdwg.mxu0
    %2937 = vmatprep.subr.bf16.mxu0 %v2080
    %2938 = vmatpush1.bf16.msra.mxu0 %v2079
    %2939 = vmatprep.subr.bf16.mxu0 %v2082
    %2940 = vmatpush1.bf16.msra.mxu0 %v2081
    %2941 = vmatprep.subr.bf16.mxu0 %v2084
    %2942 = vmatpush1.bf16.msra.mxu0 %v2083
    %2943 = vmatprep.subr.bf16.mxu0 %v2086
    %2944 = vmatpush1.bf16.msra.mxu0 %v2085
    %2945 = vmatprep.subr.bf16.mxu0 %v2088
    %2946 = vmatpush1.bf16.msra.mxu0 %v2087
    %2947 = vmatprep.subr.bf16.mxu0 %v2090
    %2948 = vmatpush1.bf16.msra.mxu0 %v2089
    %2949 = vmatprep.subr.bf16.mxu0 %v2092
    %2950 = vmatpush1.bf16.msra.mxu0 %v2091
    %2951 = vmatprep.subr.bf16.mxu0 %v2094
    %2952 = vmatpush1.bf16.msra.mxu0 %v2093
    %2953 = vmatprep.subr.bf16.mxu0 %v2096
    %2954 = vmatpush1.bf16.msra.mxu0 %v2095
    %2955 = vmatprep.subr.bf16.mxu0 %v2098
    %2956 = vmatpush1.bf16.msra.mxu0 %v2097
    %2957 = vmatprep.subr.bf16.mxu0 %v2100
    %2958 = vmatpush1.bf16.msra.mxu0 %v2099
    %2959 = vmatprep.subr.bf16.mxu0 %v2102
    %2960 = vmatpush1.bf16.msra.mxu0 %v2101
    %2961 = vmatprep.subr.bf16.mxu0 %v2104
    %2962 = vmatpush1.bf16.msra.mxu0 %v2103
    %2963 = vmatprep.subr.bf16.mxu0 %v2106
    %2964 = vmatpush1.bf16.msra.mxu0 %v2105
    %2965 = vmatprep.subr.bf16.mxu0 %v2108
    %2966 = vmatpush1.bf16.msra.mxu0 %v2107
    %2967 = vmatprep.subr.bf16.mxu0 %v2110
    %2968 = vmatpush1.bf16.msra.mxu0 %v2109
    %2969 = vmatprep.mubr.bf16.mxu0 %v580
    %2970 = vmatmul.mubr.bf16.gmra.mrb[0].mxu0 %v579
    %v2971 = vpop.f32.mrb[0].mxu0
    %v2972 = vadd.f32 %v2931, %v2971
    %v2973 = vpop.f32.mrb[0].mxu0
    %v2974 = vadd.f32 %v2933, %v2973
    %v2975 = vpop.f32.mrb[0].mxu0
    %v2976 = vpop.f32.mrb[0].mxu0
    %2977 = vdwg.mxu0
    %2978 = vmatprep.subr.bf16.mxu0 %v2112
    %2979 = vmatpush1.bf16.msra.mxu0 %v2111
    %2980 = vmatprep.subr.bf16.mxu0 %v2114
    %2981 = vmatpush1.bf16.msra.mxu0 %v2113
    %2982 = vmatprep.subr.bf16.mxu0 %v2116
    %2983 = vmatpush1.bf16.msra.mxu0 %v2115
    %2984 = vmatprep.subr.bf16.mxu0 %v2118
    %2985 = vmatpush1.bf16.msra.mxu0 %v2117
    %2986 = vmatprep.subr.bf16.mxu0 %v2120
    %2987 = vmatpush1.bf16.msra.mxu0 %v2119
    %2988 = vmatprep.subr.bf16.mxu0 %v2122
    %2989 = vmatpush1.bf16.msra.mxu0 %v2121
    %2990 = vmatprep.subr.bf16.mxu0 %v2124
    %2991 = vmatpush1.bf16.msra.mxu0 %v2123
    %2992 = vmatprep.subr.bf16.mxu0 %v2126
    %2993 = vmatpush1.bf16.msra.mxu0 %v2125
    %2994 = vmatprep.subr.bf16.mxu0 %v2128
    %2995 = vmatpush1.bf16.msra.mxu0 %v2127
    %2996 = vmatprep.subr.bf16.mxu0 %v2130
    %2997 = vmatpush1.bf16.msra.mxu0 %v2129
    %2998 = vmatprep.subr.bf16.mxu0 %v2132
    %2999 = vmatpush1.bf16.msra.mxu0 %v2131
    %3000 = vmatprep.subr.bf16.mxu0 %v2134
    %3001 = vmatpush1.bf16.msra.mxu0 %v2133
    %3002 = vmatprep.subr.bf16.mxu0 %v2136
    %3003 = vmatpush1.bf16.msra.mxu0 %v2135
    %3004 = vmatprep.subr.bf16.mxu0 %v2138
    %3005 = vmatpush1.bf16.msra.mxu0 %v2137
    %3006 = vmatprep.subr.bf16.mxu0 %v2140
    %3007 = vmatpush1.bf16.msra.mxu0 %v2139
    %3008 = vmatprep.subr.bf16.mxu0 %v2142
    %3009 = vmatpush1.bf16.msra.mxu0 %v2141
    %3010 = vmatprep.mubr.bf16.mxu0 %v582
    %3011 = vmatmul.mubr.bf16.gmra.mrb[0].mxu0 %v581
    %v3012 = vpop.f32.mrb[0].mxu0
    %v3013 = vadd.f32 %v2972, %v3012
    %v3014 = vpop.f32.mrb[0].mxu0
    %v3015 = vadd.f32 %v2974, %v3014
    %v3016 = vpop.f32.mrb[0].mxu0
    %v3017 = vpop.f32.mrb[0].mxu0
    %3018 = vdwg.mxu0
    %v3019 = vmax.f32 %v3013, 0.0
    %v3020 = vmax.f32 %v3015, 0.0
    %v3021 = vpack.c.bf16 %v3019, %v3019
    %v3022 = vpack.c.bf16 %v3020, %v3020
    %v3023 = vld [vmem:[#allocation8] sm:$0xff]
    %v3024 = vld [vmem:[#allocation8 + $0x8] sm:$0xff]
    %v3025 = vld [vmem:[#allocation8 + $0x10] sm:$0xff]
    %v3026 = vld [vmem:[#allocation8 + $0x18] sm:$0xff]
    %v3027 = vld [vmem:[#allocation8 + $0x20] sm:$0xff]
    %v3028 = vld [vmem:[#allocation8 + $0x28] sm:$0xff]
    %v3029 = vld [vmem:[#allocation8 + $0x30] sm:$0xff]
    %v3030 = vld [vmem:[#allocation8 + $0x38] sm:$0xff]
    %v3031 = vld [vmem:[#allocation8 + $0x40] sm:$0xff]
    %v3032 = vld [vmem:[#allocation8 + $0x48] sm:$0xff]
    %v3033 = vld [vmem:[#allocation8 + $0x50] sm:$0xff]
    %v3034 = vld [vmem:[#allocation8 + $0x58] sm:$0xff]
    %v3035 = vld [vmem:[#allocation8 + $0x60] sm:$0xff]
    %v3036 = vld [vmem:[#allocation8 + $0x68] sm:$0xff]
    %v3037 = vld [vmem:[#allocation8 + $0x70] sm:$0xff]
    %v3038 = vld [vmem:[#allocation8 + $0x78] sm:$0xff]
    %v3039 = vld [vmem:[#allocation8 + $0x80] sm:$0xff]
    %v3040 = vld [vmem:[#allocation8 + $0x88] sm:$0xff]
    %v3041 = vld [vmem:[#allocation8 + $0x90] sm:$0xff]
    %v3042 = vld [vmem:[#allocation8 + $0x98] sm:$0xff]
    %v3043 = vld [vmem:[#allocation8 + $0xa0] sm:$0xff]
    %v3044 = vld [vmem:[#allocation8 + $0xa8] sm:$0xff]
    %v3045 = vld [vmem:[#allocation8 + $0xb0] sm:$0xff]
    %v3046 = vld [vmem:[#allocation8 + $0xb8] sm:$0xff]
    %v3047 = vld [vmem:[#allocation8 + $0xc0] sm:$0xff]
    %v3048 = vld [vmem:[#allocation10] sm:$0x3]
    %v3050 = vlaneseq
    %v3051 = vshrl.u32 %v3050, 7
    %v3052 = vsub.s32 0, %v3051
    %v3053 = vrot.slane %v3048, %v3052
    %v3054 = vlaneseq
    %v3055 = vshrl.u32 %v3054, 7
    %v3056 = vsub.s32 1, %v3055
    %v3057 = vrot.slane %v3048, %v3056
    %v3085 = vunpack.c.l.b16 %v3023
    %v3086 = vunpack.c.h.b16 %v3023
    %v3087 = vunpack.c.l.b16 %v3024
    %v3088 = vunpack.c.h.b16 %v3024
    %v3089 = vunpack.c.l.b16 %v3025
    %v3090 = vunpack.c.h.b16 %v3025
    %v3091 = vunpack.c.l.b16 %v3026
    %v3092 = vunpack.c.h.b16 %v3026
    %v3093 = vunpack.c.l.b16 %v3027
    %v3094 = vunpack.c.h.b16 %v3027
    %v3095 = vunpack.c.l.b16 %v3028
    %v3096 = vunpack.c.h.b16 %v3028
    %v3097 = vunpack.c.l.b16 %v3029
    %v3098 = vunpack.c.h.b16 %v3029
    %v3099 = vunpack.c.l.b16 %v3030
    %v3100 = vunpack.c.h.b16 %v3030
    %v3101 = vunpack.c.l.b16 %v3031
    %v3102 = vunpack.c.h.b16 %v3031
    %v3103 = vunpack.c.l.b16 %v3032
    %v3104 = vunpack.c.h.b16 %v3032
    %v3105 = vunpack.c.l.b16 %v3033
    %v3106 = vunpack.c.h.b16 %v3033
    %v3107 = vunpack.c.l.b16 %v3034
    %v3108 = vunpack.c.h.b16 %v3034
    %v3109 = vunpack.c.l.b16 %v3035
    %v3110 = vunpack.c.h.b16 %v3035
    %v3111 = vunpack.c.l.b16 %v3036
    %v3112 = vunpack.c.h.b16 %v3036
    %v3113 = vunpack.c.l.b16 %v3037
    %v3114 = vunpack.c.h.b16 %v3037
    %v3115 = vunpack.c.l.b16 %v3038
    %v3116 = vunpack.c.h.b16 %v3038
    %v3117 = vunpack.c.l.b16 %v3039
    %v3118 = vunpack.c.h.b16 %v3039
    %v3119 = vunpack.c.l.b16 %v3040
    %v3120 = vunpack.c.h.b16 %v3040
    %v3121 = vunpack.c.l.b16 %v3041
    %v3122 = vunpack.c.h.b16 %v3041
    %v3123 = vunpack.c.l.b16 %v3042
    %v3124 = vunpack.c.h.b16 %v3042
    %v3125 = vunpack.c.l.b16 %v3043
    %v3126 = vunpack.c.h.b16 %v3043
    %v3127 = vunpack.c.l.b16 %v3044
    %v3128 = vunpack.c.h.b16 %v3044
    %v3129 = vunpack.c.l.b16 %v3045
    %v3130 = vunpack.c.h.b16 %v3045
    %v3131 = vunpack.c.l.b16 %v3046
    %v3132 = vunpack.c.h.b16 %v3046
    %v3133 = vunpack.c.l.b16 %v3047
    %v3134 = vunpack.c.h.b16 %v3047
    %v3135 = vpack.c.b16 %v3087, %v3085
    %v3136 = vpack.c.b16 %v3088, %v3086
    %v3137 = vpack.c.b16 %v3091, %v3089
    %v3138 = vpack.c.b16 %v3092, %v3090
    %v3139 = vpack.c.b16 %v3095, %v3093
    %v3140 = vpack.c.b16 %v3096, %v3094
    %v3141 = vpack.c.b16 %v3099, %v3097
    %v3142 = vpack.c.b16 %v3100, %v3098
    %v3143 = vpack.c.b16 %v3103, %v3101
    %v3144 = vpack.c.b16 %v3104, %v3102
    %v3145 = vpack.c.b16 %v3107, %v3105
    %v3146 = vpack.c.b16 %v3108, %v3106
    %v3147 = vpack.c.b16 %v3111, %v3109
    %v3148 = vpack.c.b16 %v3112, %v3110
    %v3149 = vpack.c.b16 %v3115, %v3113
    %v3150 = vpack.c.b16 %v3116, %v3114
    %v3151 = vpack.c.b16 %v3119, %v3117
    %v3152 = vpack.c.b16 %v3120, %v3118
    %v3153 = vpack.c.b16 %v3123, %v3121
    %v3154 = vpack.c.b16 %v3124, %v3122
    %v3155 = vpack.c.b16 %v3127, %v3125
    %v3156 = vpack.c.b16 %v3128, %v3126
    %v3157 = vpack.c.b16 %v3131, %v3129
    %v3158 = vpack.c.b16 %v3132, %v3130
    %v3159 = vpack.c.b16 %v3133, %v3133
    %v3160 = vpack.c.b16 %v3134, %v3134
    %vm3185 = vcmask 588800
    %v3187 = vsel %vm3185, %v3022, 0
    %vm3189 = vcmask 1043456
    %v3191 = vsel %vm3189, %v3159, 0
    %v3194 = vsel %vm3189, %v3160, 0
    %3196 = vmatprep.subr.bf16.mxu0 %v3136
    %3197 = vmatpush1.bf16.msra.mxu0 %v3135
    %3198 = vmatprep.subr.bf16.mxu0 %v3138
    %3199 = vmatpush1.bf16.msra.mxu0 %v3137
    %3200 = vmatprep.subr.bf16.mxu0 %v3140
    %3201 = vmatpush1.bf16.msra.mxu0 %v3139
    %3202 = vmatprep.subr.bf16.mxu0 %v3142
    %3203 = vmatpush1.bf16.msra.mxu0 %v3141
    %3204 = vmatprep.subr.bf16.mxu0 %v3144
    %3205 = vmatpush1.bf16.msra.mxu0 %v3143
    %3206 = vmatprep.subr.bf16.mxu0 %v3146
    %3207 = vmatpush1.bf16.msra.mxu0 %v3145
    %3208 = vmatprep.subr.bf16.mxu0 %v3148
    %3209 = vmatpush1.bf16.msra.mxu0 %v3147
    %3210 = vmatprep.subr.bf16.mxu0 %v3150
    %3211 = vmatpush1.bf16.msra.mxu0 %v3149
    %3212 = vmatprep.subr.bf16.mxu0 %v3152
    %3213 = vmatpush1.bf16.msra.mxu0 %v3151
    %3214 = vmatprep.subr.bf16.mxu0 %v3154
    %3215 = vmatpush1.bf16.msra.mxu0 %v3153
    %3216 = vmatprep.subr.bf16.mxu0 %v3156
    %3217 = vmatpush1.bf16.msra.mxu0 %v3155
    %3218 = vmatprep.subr.bf16.mxu0 %v3158
    %3219 = vmatpush1.bf16.msra.mxu0 %v3157
    %3220 = vmatprep.subr.bf16.mxu0 %v3194
    %3221 = vmatpush1.bf16.msra.mxu0 %v3191
    %3222 = vmatprep.subr.bf16.mxu0 0
    %3223 = vmatpush1.bf16.msra.mxu0 0
    %3224 = vmatprep.subr.bf16.mxu0 0
    %3225 = vmatpush1.bf16.msra.mxu0 0
    %3226 = vmatprep.subr.bf16.mxu0 0
    %3227 = vmatpush1.bf16.msra.mxu0 0
    %3228 = vmatprep.mubr.bf16.mxu0 %v3187
    %3229 = vmatmul.mubr.bf16.gmra.mrb[0].mxu0 %v3021
    %v3230 = vpop.f32.mrb[0].mxu0
    %v3231 = vadd.f32 %v3053, %v3230
    %v3232 = vpop.f32.mrb[0].mxu0
    %v3233 = vadd.f32 %v3057, %v3232
    %v3234 = vpop.f32.mrb[0].mxu0
    %v3235 = vpop.f32.mrb[0].mxu0
    %3236 = vdwg.mxu0
    %v3237 = vmax.f32 %v3231, 0.0
    %v3238 = vmax.f32 %v3233, 0.0
    %v3239 = vpack.c.bf16 %v3237, %v3237
    %v3240 = vpack.c.bf16 %v3238, %v3238
    %v3241 = vld [vmem:[#allocation11] sm:$0xf]
    %v3242 = vld [vmem:[#allocation11 + $0x4] sm:$0xf]
    %v3243 = vld [vmem:[#allocation11 + $0x8] sm:$0xf]
    %v3244 = vld [vmem:[#allocation11 + $0xc] sm:$0xf]
    %v3245 = vld [vmem:[#allocation11 + $0x10] sm:$0xf]
    %v3246 = vld [vmem:[#allocation11 + $0x14] sm:$0xf]
    %v3247 = vld [vmem:[#allocation11 + $0x18] sm:$0xf]
    %v3248 = vld [vmem:[#allocation11 + $0x1c] sm:$0xf]
    %v3249 = vld [vmem:[#allocation11 + $0x20] sm:$0xf]
    %v3250 = vld [vmem:[#allocation11 + $0x24] sm:$0xf]
    %v3251 = vld [vmem:[#allocation11 + $0x28] sm:$0xf]
    %v3252 = vld [vmem:[#allocation11 + $0x2c] sm:$0xf]
    %v3253 = vld [vmem:[#allocation11 + $0x30] sm:$0xf]
    %v3254 = vld [vmem:[#allocation11 + $0x34] sm:$0xf]
    %v3255 = vld [vmem:[#allocation11 + $0x38] sm:$0xf]
    %v3256 = vld [vmem:[#allocation11 + $0x3c] sm:$0xf]
    %v3257 = vld [vmem:[#allocation11 + $0x40] sm:$0xf]
    %v3258 = vld [vmem:[#allocation11 + $0x44] sm:$0xf]
    %v3259 = vld [vmem:[#allocation11 + $0x48] sm:$0xf]
    %v3260 = vld [vmem:[#allocation11 + $0x4c] sm:$0xf]
    %v3261 = vld [vmem:[#allocation11 + $0x50] sm:$0xf]
    %v3262 = vld [vmem:[#allocation11 + $0x54] sm:$0xf]
    %v3263 = vld [vmem:[#allocation11 + $0x58] sm:$0xf]
    %v3264 = vld [vmem:[#allocation11 + $0x5c] sm:$0xf]
    %v3265 = vld [vmem:[#allocation11 + $0x60] sm:$0xf]
    %v3266 = vld [vmem:[#allocation13] sm:$0x1]
    %v3268 = vlaneseq
    %v3269 = vshrl.u32 %v3268, 7
    %v3270 = vsub.s32 0, %v3269
    %v3271 = vrot.slane %v3266, %v3270
    %v3298 = vunpack.c.l.b16 %v3241
    %v3299 = vunpack.c.l.b16 %v3242
    %v3300 = vunpack.c.l.b16 %v3243
    %v3301 = vunpack.c.l.b16 %v3244
    %v3302 = vunpack.c.l.b16 %v3245
    %v3303 = vunpack.c.l.b16 %v3246
    %v3304 = vunpack.c.l.b16 %v3247
    %v3305 = vunpack.c.l.b16 %v3248
    %v3306 = vunpack.c.l.b16 %v3249
    %v3307 = vunpack.c.l.b16 %v3250
    %v3308 = vunpack.c.l.b16 %v3251
    %v3309 = vunpack.c.l.b16 %v3252
    %v3310 = vunpack.c.l.b16 %v3253
    %v3311 = vunpack.c.l.b16 %v3254
    %v3312 = vunpack.c.l.b16 %v3255
    %v3313 = vunpack.c.l.b16 %v3256
    %v3314 = vunpack.c.l.b16 %v3257
    %v3315 = vunpack.c.l.b16 %v3258
    %v3316 = vunpack.c.l.b16 %v3259
    %v3317 = vunpack.c.l.b16 %v3260
    %v3318 = vunpack.c.l.b16 %v3261
    %v3319 = vunpack.c.l.b16 %v3262
    %v3320 = vunpack.c.l.b16 %v3263
    %v3321 = vunpack.c.l.b16 %v3264
    %v3322 = vunpack.c.l.b16 %v3265
    %v3323 = vpack.c.b16 %v3299, %v3298
    %v3324 = vpack.c.b16 %v3301, %v3300
    %v3325 = vpack.c.b16 %v3303, %v3302
    %v3326 = vpack.c.b16 %v3305, %v3304
    %v3327 = vpack.c.b16 %v3307, %v3306
    %v3328 = vpack.c.b16 %v3309, %v3308
    %v3329 = vpack.c.b16 %v3311, %v3310
    %v3330 = vpack.c.b16 %v3313, %v3312
    %v3331 = vpack.c.b16 %v3315, %v3314
    %v3332 = vpack.c.b16 %v3317, %v3316
    %v3333 = vpack.c.b16 %v3319, %v3318
    %v3334 = vpack.c.b16 %v3321, %v3320
    %v3335 = vpack.c.b16 %v3322, %v3322
    %v3349 = vsel %vm3185, %v3240, 0
    %v3352 = vsel %vm3189, %v3335, 0
    %3354 = vmatprep.subr.bf16.mxu0 0
    %3355 = vmatpush1.bf16.msra.mxu0 %v3323
    %3356 = vmatprep.subr.bf16.mxu0 0
    %3357 = vmatpush1.bf16.msra.mxu0 %v3324
    %3358 = vmatprep.subr.bf16.mxu0 0
    %3359 = vmatpush1.bf16.msra.mxu0 %v3325
    %3360 = vmatprep.subr.bf16.mxu0 0
    %3361 = vmatpush1.bf16.msra.mxu0 %v3326
    %3362 = vmatprep.subr.bf16.mxu0 0
    %3363 = vmatpush1.bf16.msra.mxu0 %v3327
    %3364 = vmatprep.subr.bf16.mxu0 0
    %3365 = vmatpush1.bf16.msra.mxu0 %v3328
    %3366 = vmatprep.subr.bf16.mxu0 0
    %3367 = vmatpush1.bf16.msra.mxu0 %v3329
    %3368 = vmatprep.subr.bf16.mxu0 0
    %3369 = vmatpush1.bf16.msra.mxu0 %v3330
    %3370 = vmatprep.subr.bf16.mxu0 0
    %3371 = vmatpush1.bf16.msra.mxu0 %v3331
    %3372 = vmatprep.subr.bf16.mxu0 0
    %3373 = vmatpush1.bf16.msra.mxu0 %v3332
    %3374 = vmatprep.subr.bf16.mxu0 0
    %3375 = vmatpush1.bf16.msra.mxu0 %v3333
    %3376 = vmatprep.subr.bf16.mxu0 0
    %3377 = vmatpush1.bf16.msra.mxu0 %v3334
    %3378 = vmatprep.subr.bf16.mxu0 0
    %3379 = vmatpush1.bf16.msra.mxu0 %v3352
    %3380 = vmatprep.subr.bf16.mxu0 0
    %3381 = vmatpush1.bf16.msra.mxu0 0
    %3382 = vmatprep.subr.bf16.mxu0 0
    %3383 = vmatpush1.bf16.msra.mxu0 0
    %3384 = vmatprep.subr.bf16.mxu0 0
    %3385 = vmatpush1.bf16.msra.mxu0 0
    %3386 = vmatprep.mubr.bf16.mxu0 %v3349
    %3387 = vmatmul.mubr.bf16.gmra.mrb[0].mxu0 %v3239
    %v3388 = vpop.f32.mrb[0].mxu0
    %v3389 = vadd.f32 %v3271, %v3388
    %v3390 = vpop.f32.mrb[0].mxu0
    %v3391 = vpop.f32.mrb[0].mxu0
    %v3392 = vpop.f32.mrb[0].mxu0
    %3393 = vdwg.mxu0
    %vm3394 = vcmask 80896
    %3395 = vst.msk [vmem:[#allocation14] sm:$0xff] %vm3394, %v3389
    // Predicated region
    $region58: #{tpu_custom_call.1} parent=1 // pred_check
      _
    $region59: #{tpu_custom_call.1} parent=1 // pred_check_branch
      %3397 = sbr.rel (0) target = $region61
    $region60: #{tpu_custom_call.1} parent=1 // pred_region
      %s3399 = ssub.s32 128, 128
      %3400 = vsyncadd [#allocation4], %s3399
      %s3402 = sshll.u32 [#allocation14], 4
      %s3403 = int_to_ptr.vmem [resolvable:$true] %s3402
      %3405 = dma.vmem_to_hbm [thread:$0]  %s3403, 128, %s7, [#allocation4]
    $region61: #{tpu_custom_call.1} parent=1 // pred_fallthru
      _
    // Predicated region
    $region62: #{tpu_custom_call.1} parent=1 // pred_check
      _
    $region63: #{tpu_custom_call.1} parent=1 // pred_check_branch
      %3407 = sbr.rel (0) target = $region65
    $region64: #{tpu_custom_call.1} parent=1 // pred_region
      %3408 = dma.done [#allocation4], 128
    $region65: #{tpu_custom_call.1} parent=1 // pred_fallthru
      _
    %3409 = vsyncpa [#allocation3], 1
    %3410 = vsyncpa [#allocation6], 1
    %3411 = vsyncpa [#allocation9], 1
    %3412 = vsyncpa [#allocation12], 1
    %3413 = vsyncpa [#allocation4], 1

</llo_original>
